<compile_context>
chip_gen: v5e
topology: v5e:2x2
jax: 0.10.0
libtpu: 0.0.40
codegen_flags: <defaults>
</compile_context>

<pallas_src>
import functools

import jax
import jax.numpy as jnp
from jax import lax
from jax.experimental import pallas as pl
from jax.experimental.pallas import tpu as pltpu


# ---------------------------------------------------------------------------
# Pass 1: phase-decomposed transposed conv (fat MXU matmul) + fused BN partials
# ---------------------------------------------------------------------------
def _conv_stats_kernel(x_ref, w_ref, y_ref, stats_ref, *scratch, th, W, IC, OC, fat):
    """One overlapping row band.

    x_ref     : (1, th+2, W+2, IC)  padded input band (halo rows included)
    w_ref     : (9*IC, 4*OC)  fat weights   OR  (4, 4*IC, OC)  per-phase weights
    y_ref     : (th*W, 4*OC)  conv output, phase-packed on the lane axis
    stats_ref : (1, 2, 4*OC)  per-tile [sum, sum_sq] over the th*W rows (f32)
    scratch   : [(th*W, 4*OC) f32 VMEM]  only for the per-phase (large-IC) path
    """
    x = x_ref[0]                                   # (th+2, W+2, IC)
    rows = th * W
    # 9 shared neighbourhood taps (dy, dx).
    taps = [x[dy:dy + th, dx:dx + W, :].reshape(rows, IC)
            for dy in range(3) for dx in range(3)]

    if fat:
        # Single im2col concat + single (rows, 9*IC) @ (9*IC, 4*OC) matmul.
        cols = jnp.concatenate(taps, axis=-1)                       # (rows, 9*IC)
        y = jnp.dot(cols, w_ref[...], preferred_element_type=jnp.float32)
    else:
        # Large-IC path: 4 per-phase K=4*IC matmuls written straight into an
        # f32 VMEM slab (no output concatenation).
        acc = scratch[0]
        for py in range(2):
            for px in range(2):
                p = 2 * py + px
                cols = jnp.concatenate(
                    [taps[3 * (py + d) + (px + e)] for d in range(2) for e in range(2)],
                    axis=-1)                                         # (rows, 4*IC)
                acc[:, p * OC:(p + 1) * OC] = jnp.dot(
                    cols, w_ref[p], preferred_element_type=jnp.float32)
        y = acc[...]

    y_ref[...] = y.astype(y_ref.dtype)             # bf16 intermediate in the default path
    # BatchNorm partial moments from the f32 accumulator (lane = (phase, oc)).
    s1 = jnp.sum(y, axis=0, keepdims=True)
    s2 = jnp.sum(y * y, axis=0, keepdims=True)
    stats_ref[0] = jnp.concatenate([s1, s2], axis=0)


# ---------------------------------------------------------------------------
# Pass 2: BatchNorm affine + ReLU on the flat phase-packed slab
# ---------------------------------------------------------------------------
def _bn_relu_kernel(y_ref, scale_ref, shift_ref, o_ref):
    y = y_ref[...].astype(jnp.float32)
    o_ref[...] = jnp.maximum(y * scale_ref[...] + shift_ref[...], 0.0).astype(o_ref.dtype)


# ---------------------------------------------------------------------------
# Heuristics
# ---------------------------------------------------------------------------
def _prefer_fat_matmul(IC, OC):
    # Conservative 128-wide MXU granule (v5e); the fat matmul is used only when it
    # needs no more MXU passes than 4 per-phase K=4*IC matmuls.
    cdiv = lambda a, b: -(-a // b)
    fat_passes = cdiv(9 * IC, 128) * cdiv(4 * OC, 128)
    phase_passes = 4 * cdiv(4 * IC, 128) * cdiv(OC, 128)
    return fat_passes <= phase_passes


def _vmem_budget():
    try:
        cap = int(pltpu.get_tpu_info().vmem_capacity_bytes)
    except Exception:
        cap = 64 * 1024 * 1024          # conservative default (v7x per-TC VMEM)
    limit = max(32 * 1024 * 1024, min(cap // 2, 64 * 1024 * 1024))
    return limit, int(limit * 0.6)


def _pick_tile_h(N, H, W, IC, OC, isz_in, isz_mid, fat, budget):
    cand = [t for t in range(1, H + 1) if H % t == 0 and (t * W) % 8 == 0] or [H]

    def est(t):
        rows = t * W
        in_blk = (t + 2) * (W + 2) * IC * isz_in
        y_blk = rows * 4 * OC * isz_mid
        w_b = (9 * IC * 4 * OC if fat else 16 * IC * OC) * isz_in
        temps = (9 * rows * IC * isz_in                     # tap copies
                 + rows * (9 if fat else 4) * IC * isz_in   # im2col concat
                 + rows * 4 * OC * 4                        # f32 matmul result
                 + rows * 4 * OC * isz_mid                  # store cast
                 + (0 if fat else rows * 4 * OC * 4))       # acc scratch
        return 2 * (in_blk + y_blk + 2 * 4 * OC * 4) + 2 * w_b + int(1.25 * temps)

    fitting = [t for t in cand if est(t) <= budget]
    if not fitting:
        return min(cand)                 # best effort for huge W*IC configurations
    both_cores = [t for t in fitting if N * (H // t) >= 2]   # keep both v7x TCs busy
    return max(both_cores) if both_cores else max(fitting)


def _pick_bn_rows(R, lanes, isz_mid, budget):
    per_row = lanes * (4 * isz_mid + 8)   # double-buffered in+out + f32 temporaries
    cap = max(8, budget // per_row)
    if R <= cap:
        return R
    tr = (cap // 8) * 8
    while tr >= 8 and R % tr:
        tr -= 8
    return tr if tr >= 8 else R


# ---------------------------------------------------------------------------
# Wrapper: PyTorch-style NCHW / (IC, OC, 4, 4) in, NCHW out.
# ---------------------------------------------------------------------------
def g_block_forward(x_nchw, w_tconv, gamma, beta, *, eps=1e-5,
                    compute_dtype=jnp.bfloat16, tile_h=None,
                    force_phase_path=False):
    N, IC, H, W = x_nchw.shape
    IC2, OC, KH, KW = w_tconv.shape
    assert IC == IC2 and KH == 4 and KW == 4, "specialized to k=4, s=2, p=1"

    compute_dtype = jnp.dtype(compute_dtype)
    inter_dtype = (jnp.dtype(jnp.bfloat16) if compute_dtype == jnp.dtype(jnp.bfloat16)
                   else jnp.dtype(jnp.float32))
    isz_in, isz_mid = compute_dtype.itemsize, inter_dtype.itemsize
    lanes = 4 * OC

    use_fat = (not force_phase_path) and _prefer_fat_matmul(IC, OC)
    vmem_limit, budget = _vmem_budget()

    # ---- row-band tiling ---------------------------------------------------
    if tile_h is None:
        th = _pick_tile_h(N, H, W, IC, OC, isz_in, isz_mid, use_fat, budget)
    else:
        th = int(tile_h)
        assert H % th == 0 and (th * W) % 8 == 0
    nH = H // th
    G = N * nH

    # ---- layout glue: NCHW -> NHWC, +1 pad, overlapping row bands -----------
    xp = jnp.pad(jnp.transpose(x_nchw, (0, 2, 3, 1)).astype(compute_dtype),
                 ((0, 0), (1, 1), (1, 1), (0, 0)))                  # (N, H+2, W+2, IC)
    if nH == 1:
        xb = xp                                                     # (G, H+2, W+2, IC)
    else:
        xb = jnp.stack([xp[:, i * th:i * th + th + 2] for i in range(nH)], axis=1)
        xb = xb.reshape(G, th + 2, W + 2, IC)
    # TODO(synk): for tiny IC (<~32) folding W into the lane axis (+ pltpu.roll taps)
    # would lift vreg utilization of the im2col; channels-last kept for generality.

    # ---- im2col weights ------------------------------------------------------
    # Per-phase packing: wmat[2*py+px, (2*d+e)*IC + ic, oc] = w[ic, oc, 3-(2d+py), 3-(2e+px)]
    wf = jnp.transpose(w_tconv[:, :, ::-1, ::-1], (2, 3, 0, 1)).astype(jnp.float32)
    wf = wf.reshape(2, 2, 2, 2, IC, OC)                             # (d, py, e, px, IC, OC)
    wmat = jnp.transpose(wf, (1, 3, 0, 2, 4, 5)).reshape(4, 4 * IC, OC)
    if use_fat:
        # Scatter each phase's 4 taps into the (9*IC, 4*OC) fat matrix; the other
        # 5 tap-blocks stay zero and ride along in the same MXU K-pass.
        w_fat = jnp.zeros((9 * IC, 4 * OC), jnp.float32)
        for py in range(2):
            for px in range(2):
                p = 2 * py + px
                for d in range(2):
                    for e in range(2):
                        t = 3 * (py + d) + (px + e)
                        w_fat = w_fat.at[t * IC:(t + 1) * IC,
                                         p * OC:(p + 1) * OC].set(
                            wmat[p, (2 * d + e) * IC:(2 * d + e + 1) * IC, :])
        w_kernel = w_fat.astype(compute_dtype)
    else:
        w_kernel = wmat.astype(compute_dtype)
    w_zero_idx = (0,) * w_kernel.ndim

    cparams = pltpu.CompilerParams(dimension_semantics=("parallel",),
                                   vmem_limit_bytes=vmem_limit)

    # ---- pass 1: conv + BN partial sums --------------------------------------
    conv_kernel = functools.partial(_conv_stats_kernel,
                                    th=th, W=W, IC=IC, OC=OC, fat=use_fat)
    y, stats = pl.pallas_call(
        conv_kernel,
        grid=(G,),
        in_specs=[pl.BlockSpec((1, th + 2, W + 2, IC), lambda g: (g, 0, 0, 0)),
                  pl.BlockSpec(w_kernel.shape, lambda g: w_zero_idx)],
        out_specs=(pl.BlockSpec((th * W, lanes), lambda g: (g, 0)),
                   pl.BlockSpec((1, 2, lanes), lambda g: (g, 0, 0))),
        out_shape=(jax.ShapeDtypeStruct((N * H * W, lanes), inter_dtype),
                   jax.ShapeDtypeStruct((G, 2, lanes), jnp.float32)),
        scratch_shapes=([] if use_fat
                        else [pltpu.VMEM((th * W, lanes), jnp.float32)]),
        compiler_params=cparams,
    )(xb, w_kernel)

    # ---- BatchNorm statistics (tiny O(grid*OC) glue) --------------------------
    s = stats.sum(axis=0).reshape(2, 4, OC).sum(axis=1)              # (2, OC) f32
    cnt = jnp.float32(N * 4 * H * W)
    mean = s[0] / cnt
    # E[x^2]-E[x]^2 in f32; clamp at 0 so rsqrt never sees cancellation-induced
    # negatives (conv outputs are near-zero-mean for typical weights).
    var = jnp.maximum(s[1] / cnt - mean * mean, 0.0)
    scale_oc = gamma.astype(jnp.float32) * lax.rsqrt(var + eps)
    shift_oc = beta.astype(jnp.float32) - mean * scale_oc
    scale = jnp.tile(scale_oc, 4).reshape(1, lanes)                  # lane = p*OC + oc
    shift = jnp.tile(shift_oc, 4).reshape(1, lanes)

    # ---- pass 2: BN + ReLU, 1-D grid decoupled from the conv tiling -----------
    R = N * H * W
    TR = _pick_bn_rows(R, lanes, isz_mid, budget)
    out2d = pl.pallas_call(
        _bn_relu_kernel,
        grid=(R // TR,),
        in_specs=[pl.BlockSpec((TR, lanes), lambda i: (i, 0)),
                  pl.BlockSpec((1, lanes), lambda i: (0, 0)),
                  pl.BlockSpec((1, lanes), lambda i: (0, 0))],
        out_specs=pl.BlockSpec((TR, lanes), lambda i: (i, 0)),
        out_shape=jax.ShapeDtypeStruct((R, lanes), inter_dtype),
        input_output_aliases={0: 0},        # overwrite y in place (same shape/dtype)
        compiler_params=pltpu.CompilerParams(dimension_semantics=("parallel",),
                                             vmem_limit_bytes=vmem_limit),
    )(y, scale, shift)

    # ---- layout glue: un-interleave phases -> NCHW ----------------------------
    # Single XLA transpose over the bf16 slab (f32 cast fuses into it).
    # TODO(synk): fusing this into pass 2 needs an in-kernel 5-D lane<->sublane
    # relayout; kept in XLA for lowering robustness.
    o = out2d.reshape(N, H, W, 2, 2, OC)                 # (n, r, c, py, px, oc)
    o = jnp.transpose(o, (0, 5, 1, 3, 2, 4)).reshape(N, OC, 2 * H, 2 * W)
    return o.astype(jnp.float32)


# ---------------------------------------------------------------------------
# Pure-JAX reference (f32, matches PyTorch training-mode semantics).
# ---------------------------------------------------------------------------
def _reference(x_nchw, w_tconv, gamma, beta, eps=1e-5):
    w_conv = jnp.transpose(w_tconv, (1, 0, 2, 3))[:, :, ::-1, ::-1]   # (OC, IC, 4, 4)
    y = lax.conv_general_dilated(
        x_nchw.astype(jnp.float32), w_conv.astype(jnp.float32),
        window_strides=(1, 1), padding=[(2, 2), (2, 2)], lhs_dilation=(2, 2),
        dimension_numbers=("NCHW", "OIHW", "NCHW"))
    mean = y.mean(axis=(0, 2, 3), keepdims=True)
    var = ((y - mean) ** 2).mean(axis=(0, 2, 3), keepdims=True)
    yn = (y - mean) * lax.rsqrt(var + eps)
    yn = yn * gamma.reshape(1, -1, 1, 1) + beta.reshape(1, -1, 1, 1)
    return jnp.maximum(yn, 0.0)


if __name__ == "__main__":
    # Small deterministic setup: ic=4, oc=64, 16x16 -> 32x32.
    N, IC, OC, H, W = 2, 4, 64, 16, 16
    key = jax.random.PRNGKey(0)
    kx, kw, kg, kb = jax.random.split(key, 4)

    x = jax.random.normal(kx, (N, IC, H, W), dtype=jnp.float32)
    w_tconv = 0.1 * jax.random.normal(kw, (IC, OC, 4, 4), dtype=jnp.float32)
    gamma = 1.0 + 0.1 * jax.random.normal(kg, (OC,), dtype=jnp.float32)
    beta = 0.1 * jax.random.normal(kb, (OC,), dtype=jnp.float32)

    ref = jax.block_until_ready(_reference(x, w_tconv, gamma, beta))

    fwd = jax.jit(g_block_forward,
                  static_argnames=("compute_dtype", "tile_h", "force_phase_path"))

    # 1) default path: bf16 operands + bf16 intermediate, fat matmul, auto tiles.
    out = jax.block_until_ready(fwd(x, w_tconv, gamma, beta))
    assert out.shape == (N, OC, 2 * H, 2 * W), out.shape
    assert float(jnp.abs(out - ref).max()) < 8e-2, float(jnp.abs(out - ref).max())

    # 2) forced small row bands: exercises banding + cross-tile BN statistics.
    out2 = jax.block_until_ready(fwd(x, w_tconv, gamma, beta, tile_h=4))
    assert float(jnp.abs(out2 - ref).max()) < 8e-2, float(jnp.abs(out2 - ref).max())

    # 3) f32 path: tight numerical check of the exact module semantics.
    out3 = jax.block_until_ready(
        fwd(x, w_tconv, gamma, beta, compute_dtype=jnp.float32, tile_h=8))
    assert float(jnp.abs(out3 - ref).max()) < 1e-3, float(jnp.abs(out3 - ref).max())

    # 4) large-IC per-phase matmul branch (f32, tight check).
    out4 = jax.block_until_ready(
        fwd(x, w_tconv, gamma, beta, compute_dtype=jnp.float32, force_phase_path=True))
    assert float(jnp.abs(out4 - ref).max()) < 1e-3, float(jnp.abs(out4 - ref).max())

    print("KERNEL_OK")
</pallas_src>

<mosaic_0001>
module attributes {stable_mosaic.version = 11 : i64} {
  func.func @_conv_stats_kernel(%arg0: i32, %arg1: memref<1x18x18x4xbf16, #tpu.memory_space<vmem>>, %arg2: memref<36x256xbf16, #tpu.memory_space<vmem>>, %arg3: memref<256x256xbf16, #tpu.memory_space<vmem>>, %arg4: memref<1x2x256xf32, #tpu.memory_space<vmem>>) attributes {dimension_semantics = [#tpu.dimension_semantics<parallel>], iteration_bounds = array<i64: 2>, scalar_prefetch = 0 : i64, scratch_operands = 0 : i64, tpu.core_type = #tpu.core_type<tc>, window_params = [{transform_indices = @transform_0, window_bounds = array<i64: 1, 18, 18, 4>}, {pipeline_mode = #tpu.pipeline_mode<synchronous>, transform_indices = @transform_1, window_bounds = array<i64: 36, 256>}, {transform_indices = @transform_2, window_bounds = array<i64: 256, 256>}, {transform_indices = @transform_3, window_bounds = array<i64: 1, 2, 256>}]} {
    %c0 = arith.constant 0 : index
    %c0_0 = arith.constant 0 : index
    %c0_1 = arith.constant 0 : index
    %c0_2 = arith.constant 0 : index
    %0 = vector.load %arg1[%c0, %c0_0, %c0_1, %c0_2] : memref<1x18x18x4xbf16, #tpu.memory_space<vmem>>, vector<1x18x18x4xbf16>
    %1 = vector.shape_cast %0 : vector<1x18x18x4xbf16> to vector<18x18x4xbf16>
    %2 = vector.extract_strided_slice %1 {offsets = [0, 0, 0], sizes = [16, 16, 4], strides = [1, 1, 1]} : vector<18x18x4xbf16> to vector<16x16x4xbf16>
    %3 = vector.shape_cast %2 : vector<16x16x4xbf16> to vector<256x4xbf16>
    %4 = vector.extract_strided_slice %1 {offsets = [0, 1, 0], sizes = [16, 16, 4], strides = [1, 1, 1]} : vector<18x18x4xbf16> to vector<16x16x4xbf16>
    %5 = vector.shape_cast %4 : vector<16x16x4xbf16> to vector<256x4xbf16>
    %6 = vector.extract_strided_slice %1 {offsets = [0, 2, 0], sizes = [16, 16, 4], strides = [1, 1, 1]} : vector<18x18x4xbf16> to vector<16x16x4xbf16>
    %7 = vector.shape_cast %6 : vector<16x16x4xbf16> to vector<256x4xbf16>
    %8 = vector.extract_strided_slice %1 {offsets = [1, 0, 0], sizes = [16, 16, 4], strides = [1, 1, 1]} : vector<18x18x4xbf16> to vector<16x16x4xbf16>
    %9 = vector.shape_cast %8 : vector<16x16x4xbf16> to vector<256x4xbf16>
    %10 = vector.extract_strided_slice %1 {offsets = [1, 1, 0], sizes = [16, 16, 4], strides = [1, 1, 1]} : vector<18x18x4xbf16> to vector<16x16x4xbf16>
    %11 = vector.shape_cast %10 : vector<16x16x4xbf16> to vector<256x4xbf16>
    %12 = vector.extract_strided_slice %1 {offsets = [1, 2, 0], sizes = [16, 16, 4], strides = [1, 1, 1]} : vector<18x18x4xbf16> to vector<16x16x4xbf16>
    %13 = vector.shape_cast %12 : vector<16x16x4xbf16> to vector<256x4xbf16>
    %14 = vector.extract_strided_slice %1 {offsets = [2, 0, 0], sizes = [16, 16, 4], strides = [1, 1, 1]} : vector<18x18x4xbf16> to vector<16x16x4xbf16>
    %15 = vector.shape_cast %14 : vector<16x16x4xbf16> to vector<256x4xbf16>
    %16 = vector.extract_strided_slice %1 {offsets = [2, 1, 0], sizes = [16, 16, 4], strides = [1, 1, 1]} : vector<18x18x4xbf16> to vector<16x16x4xbf16>
    %17 = vector.shape_cast %16 : vector<16x16x4xbf16> to vector<256x4xbf16>
    %18 = vector.extract_strided_slice %1 {offsets = [2, 2, 0], sizes = [16, 16, 4], strides = [1, 1, 1]} : vector<18x18x4xbf16> to vector<16x16x4xbf16>
    %19 = vector.shape_cast %18 : vector<16x16x4xbf16> to vector<256x4xbf16>
    %20 = tpu.concatenate %3, %5, %7, %9, %11, %13, %15, %17, %19 in 1 : vector<256x4xbf16>, vector<256x4xbf16>, vector<256x4xbf16>, vector<256x4xbf16>, vector<256x4xbf16>, vector<256x4xbf16>, vector<256x4xbf16>, vector<256x4xbf16>, vector<256x4xbf16> -> vector<256x36xbf16>
    %c0_3 = arith.constant 0 : index
    %c0_4 = arith.constant 0 : index
    %21 = vector.load %arg2[%c0_3, %c0_4] : memref<36x256xbf16, #tpu.memory_space<vmem>>, vector<36x256xbf16>
    %cst = arith.constant dense<0.000000e+00> : vector<256x256xf32>
    %22 = tpu.matmul %20, %21, %cst {dimension_numbers = #tpu.dot_dimension_numbers<[1], [0], [0], [1], [0, 0, 1, 1], [], []>} : vector<256x36xbf16>, vector<36x256xbf16>, vector<256x256xf32> -> vector<256x256xf32>
    %23 = arith.truncf %22 : vector<256x256xf32> to vector<256x256xbf16>
    %c0_5 = arith.constant 0 : index
    %c0_6 = arith.constant 0 : index
    %24 = vector.load %arg3[%c0_5, %c0_6] : memref<256x256xbf16, #tpu.memory_space<vmem>>, vector<256x256xbf16>
    tpu.vector_store %arg3[%c0_5, %c0_6], %23 {strides = array<i32>} : memref<256x256xbf16, #tpu.memory_space<vmem>>, vector<256x256xbf16>,
    %cst_7 = arith.constant dense<0.000000e+00> : vector<256xf32>
    %25 = vector.multi_reduction <add>, %22, %cst_7 [0] : vector<256x256xf32> to vector<256xf32>
    %26 = vector.shape_cast %25 : vector<256xf32> to vector<1x256xf32>
    %27 = arith.mulf %22, %22 : vector<256x256xf32>
    %cst_8 = arith.constant dense<0.000000e+00> : vector<256xf32>
    %28 = vector.multi_reduction <add>, %27, %cst_8 [0] : vector<256x256xf32> to vector<256xf32>
    %29 = vector.shape_cast %28 : vector<256xf32> to vector<1x256xf32>
    %30 = tpu.concatenate %26, %29 in 0 : vector<1x256xf32>, vector<1x256xf32> -> vector<2x256xf32>
    %c0_9 = arith.constant 0 : index
    %c0_10 = arith.constant 0 : index
    %c0_11 = arith.constant 0 : index
    %31 = vector.load %arg4[%c0_9, %c0_10, %c0_11] : memref<1x2x256xf32, #tpu.memory_space<vmem>>, vector<1x2x256xf32>
    %32 = vector.shape_cast %31 : vector<1x2x256xf32> to vector<2x256xf32>
    %33 = vector.shape_cast %30 : vector<2x256xf32> to vector<1x2x256xf32>
    tpu.vector_store %arg4[%c0_9, %c0_10, %c0_11], %33 {strides = array<i32>} : memref<1x2x256xf32, #tpu.memory_space<vmem>>, vector<1x2x256xf32>,
    return
  }
  func.func @transform_0(%arg0: i32) -> (i32, i32, i32, i32) {
    %c0_i32 = arith.constant 0 : i32
    %c0_i32_0 = arith.constant 0 : i32
    %c0_i32_1 = arith.constant 0 : i32
    %c0_i32_2 = arith.constant 0 : i32
    return %arg0, %c0_i32, %c0_i32_0, %c0_i32_1 : i32, i32, i32, i32
  }
  func.func @transform_1(%arg0: i32) -> (i32, i32) {
    %c0_i32 = arith.constant 0 : i32
    %c0_i32_0 = arith.constant 0 : i32
    %c0_i32_1 = arith.constant 0 : i32
    return %c0_i32, %c0_i32_0 : i32, i32
  }
  func.func @transform_2(%arg0: i32) -> (i32, i32) {
    %c0_i32 = arith.constant 0 : i32
    %c0_i32_0 = arith.constant 0 : i32
    return %arg0, %c0_i32 : i32, i32
  }
  func.func @transform_3(%arg0: i32) -> (i32, i32, i32) {
    %c0_i32 = arith.constant 0 : i32
    %c0_i32_0 = arith.constant 0 : i32
    %c0_i32_1 = arith.constant 0 : i32
    return %arg0, %c0_i32, %c0_i32_0 : i32, i32, i32
  }
}

module attributes {stable_mosaic.version = 11 : i64} {
  func.func @_bn_relu_kernel(%arg0: i32, %arg1: memref<512x256xbf16, #tpu.memory_space<vmem>>, %arg2: memref<1x256xf32, #tpu.memory_space<vmem>>, %arg3: memref<1x256xf32, #tpu.memory_space<vmem>>, %arg4: memref<512x256xbf16, #tpu.memory_space<vmem>>) attributes {dimension_semantics = [#tpu.dimension_semantics<parallel>], iteration_bounds = array<i64: 1>, scalar_prefetch = 0 : i64, scratch_operands = 0 : i64, tpu.core_type = #tpu.core_type<tc>, window_params = [{transform_indices = @transform_0, window_bounds = array<i64: 512, 256>}, {pipeline_mode = #tpu.pipeline_mode<synchronous>, transform_indices = @transform_1, window_bounds = array<i64: 1, 256>}, {pipeline_mode = #tpu.pipeline_mode<synchronous>, transform_indices = @transform_2, window_bounds = array<i64: 1, 256>}, {transform_indices = @transform_3, window_bounds = array<i64: 512, 256>}]} {
    %c0 = arith.constant 0 : index
    %c0_0 = arith.constant 0 : index
    %0 = vector.load %arg1[%c0, %c0_0] : memref<512x256xbf16, #tpu.memory_space<vmem>>, vector<512x256xbf16>
    %1 = arith.extf %0 : vector<512x256xbf16> to vector<512x256xf32>
    %c0_1 = arith.constant 0 : index
    %c0_2 = arith.constant 0 : index
    %2 = vector.load %arg2[%c0_1, %c0_2] : memref<1x256xf32, #tpu.memory_space<vmem>>, vector<1x256xf32>
    %3 = vector.broadcast %2 : vector<1x256xf32> to vector<512x256xf32>
    %4 = arith.mulf %1, %3 : vector<512x256xf32>
    %c0_3 = arith.constant 0 : index
    %c0_4 = arith.constant 0 : index
    %5 = vector.load %arg3[%c0_3, %c0_4] : memref<1x256xf32, #tpu.memory_space<vmem>>, vector<1x256xf32>
    %6 = vector.broadcast %5 : vector<1x256xf32> to vector<512x256xf32>
    %7 = arith.addf %4, %6 : vector<512x256xf32>
    %cst = arith.constant 0.000000e+00 : f32
    %8 = vector.broadcast %cst : f32 to vector<512x256xf32>
    %9 = arith.maximumf %7, %8 : vector<512x256xf32>
    %10 = arith.truncf %9 : vector<512x256xf32> to vector<512x256xbf16>
    %c0_5 = arith.constant 0 : index
    %c0_6 = arith.constant 0 : index
    %11 = vector.load %arg4[%c0_5, %c0_6] : memref<512x256xbf16, #tpu.memory_space<vmem>>, vector<512x256xbf16>
    tpu.vector_store %arg4[%c0_5, %c0_6], %10 {strides = array<i32>} : memref<512x256xbf16, #tpu.memory_space<vmem>>, vector<512x256xbf16>,
    return
  }
  func.func @transform_0(%arg0: i32) -> (i32, i32) {
    %c0_i32 = arith.constant 0 : i32
    %c0_i32_0 = arith.constant 0 : i32
    return %arg0, %c0_i32 : i32, i32
  }
  func.func @transform_1(%arg0: i32) -> (i32, i32) {
    %c0_i32 = arith.constant 0 : i32
    %c0_i32_0 = arith.constant 0 : i32
    %c0_i32_1 = arith.constant 0 : i32
    return %c0_i32, %c0_i32_0 : i32, i32
  }
  func.func @transform_2(%arg0: i32) -> (i32, i32) {
    %c0_i32 = arith.constant 0 : i32
    %c0_i32_0 = arith.constant 0 : i32
    %c0_i32_1 = arith.constant 0 : i32
    return %c0_i32, %c0_i32_0 : i32, i32
  }
  func.func @transform_3(%arg0: i32) -> (i32, i32) {
    %c0_i32 = arith.constant 0 : i32
    %c0_i32_0 = arith.constant 0 : i32
    return %arg0, %c0_i32 : i32, i32
  }
}

</mosaic_0001>

<llo_original>
// kernel: tile.18
$region0: #{tile.18}
  #allocation0 [shape = 's32[1]{0}', space=sflag, size = 0x4, scoped, tag = 'scoped memory for tile.18']
  %s0 = inlined_call_operand.vmem [shape: f32[64], index: 0, kind: input, shape index: {}]
  %s1 = inlined_call_operand.vmem [shape: f32[4,64], index: 1, kind: output, shape index: {}]
  // Predicated region
  $region2: #{tile.18} parent=0 // pred_check
    _
  $region3: #{tile.18} parent=0 // pred_check_branch
    %3 = sbr.rel (0) target = $region5
  $region4: #{tile.18} parent=0 // pred_region
    _
  $region5: #{tile.18} parent=0 // pred_fallthru
    _
  %v4 = vld [vmem:[%s0] ss:$0 sm:$0xff]
  %5 = vst [vmem:[%s1] sm:$0xf] %v4

// kernel: tile.19
$region0: #{tile.19}
  %s0 = inlined_call_operand.vmem [shape: f32[4,64], index: 0, kind: input, shape index: {}]
  %s1 = inlined_call_operand.vmem [shape: f32[1,256], index: 1, kind: output, shape index: {}]
  $region1: #{tile.19} parent=0
    #allocation0 [shape = 'u8[8192]{0}', space=vmem, size = 0x2000, scoped, tag = 'scoped mem for output reshape']
    #allocation1 [shape = 'u8[4096]{0}', space=vmem, size = 0x1000, scoped, tag = 'scoped mem for input reshape']
    %s3 = ssub.s32 16, 1
    %v4 = vld [vmem:[%s0] sm:%s3]
    %5 = vst [vmem:[#allocation1] sm:%s3] %v4
    %s6 = smov 3
    %v7 = vld [vmem:[#allocation1] ss:$2 sm:%s6]
    %vm8 = vcmask 523264
    %9 = vst.msk [vmem:[#allocation0] ss:$8 sm:$0x3] %vm8, %v7
    %s10 = scalar_lea.vmem [#allocation1], 1
    %s11 = smov 3
    %v12 = vld [vmem:[%s10] ss:$2 sm:%s11]
    %13 = vrot.lane.b32.xlu0 %v12, 64
    %v14 = vpop.permute.xlu0 %13
    %vm15 = vcmask 1048064
    %16 = vst.msk [vmem:[#allocation0] ss:$8 sm:$0x3] %vm15, %v14
    %s18 = ssub.s32 2, 1
    %v19 = vld [vmem:[#allocation0] sm:%s18]
    %s21 = ssub.s32 2, 1
    %22 = vst [vmem:[%s1] sm:%s21] %v19
    %s23 = scalar_lea.vmem [#allocation0], 8
    %v24 = vld [vmem:[%s23] sm:%s18]
    %s26 = ssub.s32 2, 1
    %s27 = scalar_lea.vmem %s1, 1
    %28 = vst [vmem:[%s27] sm:%s26] %v24

// kernel: g_block_forward.3
$region0: #{g_block_forward.3}
  #allocation0 [shape = 'u32[]', space=smem, size = 0x4, offset = 0x4, fixed_abs, tag = 'smem constant byte address 0x4 - core index']
  #allocation1 [shape = 'u32[72,128]{1,0:T(1,128)}', space=vmem, size = 0x9000, scoped, tag = 'internal scratch']
  %s0 = inlined_call_operand.vmem [shape: bf16[512,256], index: 0, kind: input, shape index: {}, may-alias: {0,3}]
  %s1 = inlined_call_operand.vmem [shape: f32[1,256], index: 1, kind: input, shape index: {}]
  %s2 = inlined_call_operand.vmem [shape: f32[1,256], index: 2, kind: input, shape index: {}]
  %s3 = inlined_call_operand.vmem [shape: bf16[512,256], index: 3, kind: output, shape index: {}, may-alias: {0,3}]
  %s4 = sld [smem:[#allocation0]]
  $region22: #{g_block_forward.3} parent=0
    _
  %s6 = ssub.s32 1, %s4
  %s7 = scalar_select 0, %s6, %s4
  // Predicated region
  $region2: #{g_block_forward.3} parent=0 // pred_check
    _
  $region3: #{g_block_forward.3} parent=0 // pred_check_branch
    %9 = sbr.rel (0) target = $region5
  $region4: #{g_block_forward.3} parent=0 // pred_region
    _
  $region5: #{g_block_forward.3} parent=0 // pred_fallthru
    _
  // Predicated region
  $region6: #{g_block_forward.3} parent=0 // pred_check
    _
  $region7: #{g_block_forward.3} parent=0 // pred_check_branch
    %11 = sbr.rel (0) target = $region9
  $region8: #{g_block_forward.3} parent=0 // pred_region
    _
  $region9: #{g_block_forward.3} parent=0 // pred_fallthru
    _
  // Predicated region
  $region10: #{g_block_forward.3} parent=0 // pred_check
    _
  $region11: #{g_block_forward.3} parent=0 // pred_check_branch
    %13 = sbr.rel (0) target = $region13
  $region12: #{g_block_forward.3} parent=0 // pred_region
    _
  $region13: #{g_block_forward.3} parent=0 // pred_fallthru
    _
  %v14 = vld [vmem:[%s0] sm:$0xff]
  %v15 = vld [vmem:[%s0 + $0x8] sm:$0xff]
  %v16 = vld [vmem:[%s0 + $0x10] sm:$0xff]
  %v17 = vld [vmem:[%s0 + $0x18] sm:$0xff]
  %v18 = vld [vmem:[%s0 + $0x20] sm:$0xff]
  %v19 = vld [vmem:[%s0 + $0x28] sm:$0xff]
  %v20 = vld [vmem:[%s0 + $0x30] sm:$0xff]
  %v21 = vld [vmem:[%s0 + $0x38] sm:$0xff]
  %v22 = vld [vmem:[%s0 + $0x40] sm:$0xff]
  %v23 = vld [vmem:[%s0 + $0x48] sm:$0xff]
  %v24 = vld [vmem:[%s0 + $0x50] sm:$0xff]
  %v25 = vld [vmem:[%s0 + $0x58] sm:$0xff]
  %v26 = vld [vmem:[%s0 + $0x60] sm:$0xff]
  %v27 = vld [vmem:[%s0 + $0x68] sm:$0xff]
  %v28 = vld [vmem:[%s0 + $0x70] sm:$0xff]
  %v29 = vld [vmem:[%s0 + $0x78] sm:$0xff]
  %v30 = vld [vmem:[%s0 + $0x80] sm:$0xff]
  %v31 = vld [vmem:[%s0 + $0x88] sm:$0xff]
  %v32 = vld [vmem:[%s0 + $0x90] sm:$0xff]
  %v33 = vld [vmem:[%s0 + $0x98] sm:$0xff]
  %v34 = vld [vmem:[%s0 + $0xa0] sm:$0xff]
  %v35 = vld [vmem:[%s0 + $0xa8] sm:$0xff]
  %v36 = vld [vmem:[%s0 + $0xb0] sm:$0xff]
  %v37 = vld [vmem:[%s0 + $0xb8] sm:$0xff]
  %v38 = vld [vmem:[%s0 + $0xc0] sm:$0xff]
  %v39 = vld [vmem:[%s0 + $0xc8] sm:$0xff]
  %v40 = vld [vmem:[%s0 + $0xd0] sm:$0xff]
  %v41 = vld [vmem:[%s0 + $0xd8] sm:$0xff]
  %v42 = vld [vmem:[%s0 + $0xe0] sm:$0xff]
  %v43 = vld [vmem:[%s0 + $0xe8] sm:$0xff]
  %v44 = vld [vmem:[%s0 + $0xf0] sm:$0xff]
  %v45 = vld [vmem:[%s0 + $0xf8] sm:$0xff]
  %v46 = vld [vmem:[%s0 + $0x100] sm:$0xff]
  %v47 = vld [vmem:[%s0 + $0x108] sm:$0xff]
  %v48 = vld [vmem:[%s0 + $0x110] sm:$0xff]
  %v49 = vld [vmem:[%s0 + $0x118] sm:$0xff]
  %v50 = vld [vmem:[%s0 + $0x120] sm:$0xff]
  %v51 = vld [vmem:[%s0 + $0x128] sm:$0xff]
  %v52 = vld [vmem:[%s0 + $0x130] sm:$0xff]
  %v53 = vld [vmem:[%s0 + $0x138] sm:$0xff]
  %v54 = vld [vmem:[%s0 + $0x140] sm:$0xff]
  %v55 = vld [vmem:[%s0 + $0x148] sm:$0xff]
  %v56 = vld [vmem:[%s0 + $0x150] sm:$0xff]
  %v57 = vld [vmem:[%s0 + $0x158] sm:$0xff]
  %v58 = vld [vmem:[%s0 + $0x160] sm:$0xff]
  %v59 = vld [vmem:[%s0 + $0x168] sm:$0xff]
  %v60 = vld [vmem:[%s0 + $0x170] sm:$0xff]
  %v61 = vld [vmem:[%s0 + $0x178] sm:$0xff]
  %v62 = vld [vmem:[%s0 + $0x180] sm:$0xff]
  %v63 = vld [vmem:[%s0 + $0x188] sm:$0xff]
  %v64 = vld [vmem:[%s0 + $0x190] sm:$0xff]
  %v65 = vld [vmem:[%s0 + $0x198] sm:$0xff]
  %v66 = vld [vmem:[%s0 + $0x1a0] sm:$0xff]
  %v67 = vld [vmem:[%s0 + $0x1a8] sm:$0xff]
  %v68 = vld [vmem:[%s0 + $0x1b0] sm:$0xff]
  %v69 = vld [vmem:[%s0 + $0x1b8] sm:$0xff]
  %v70 = vld [vmem:[%s0 + $0x1c0] sm:$0xff]
  %v71 = vld [vmem:[%s0 + $0x1c8] sm:$0xff]
  %v72 = vld [vmem:[%s0 + $0x1d0] sm:$0xff]
  %v73 = vld [vmem:[%s0 + $0x1d8] sm:$0xff]
  %v74 = vld [vmem:[%s0 + $0x1e0] sm:$0xff]
  %v75 = vld [vmem:[%s0 + $0x1e8] sm:$0xff]
  %v76 = vld [vmem:[%s0 + $0x1f0] sm:$0xff]
  %v77 = vld [vmem:[%s0 + $0x1f8] sm:$0xff]
  %v78 = vunpack.c.l.bf16 %v14
  %v79 = vunpack.c.h.bf16 %v14
  %v80 = vunpack.c.l.bf16 %v15
  %v81 = vunpack.c.h.bf16 %v15
  %v82 = vunpack.c.l.bf16 %v16
  %v83 = vunpack.c.h.bf16 %v16
  %v84 = vunpack.c.l.bf16 %v17
  %v85 = vunpack.c.h.bf16 %v17
  %v86 = vunpack.c.l.bf16 %v18
  %v87 = vunpack.c.h.bf16 %v18
  %v88 = vunpack.c.l.bf16 %v19
  %v89 = vunpack.c.h.bf16 %v19
  %v90 = vunpack.c.l.bf16 %v20
  %v91 = vunpack.c.h.bf16 %v20
  %v92 = vunpack.c.l.bf16 %v21
  %v93 = vunpack.c.h.bf16 %v21
  %v94 = vunpack.c.l.bf16 %v22
  %v95 = vunpack.c.h.bf16 %v22
  %v96 = vunpack.c.l.bf16 %v23
  %v97 = vunpack.c.h.bf16 %v23
  %v98 = vunpack.c.l.bf16 %v24
  %v99 = vunpack.c.h.bf16 %v24
  %v100 = vunpack.c.l.bf16 %v25
  %v101 = vunpack.c.h.bf16 %v25
  %v102 = vunpack.c.l.bf16 %v26
  %v103 = vunpack.c.h.bf16 %v26
  %v104 = vunpack.c.l.bf16 %v27
  %v105 = vunpack.c.h.bf16 %v27
  %v106 = vunpack.c.l.bf16 %v28
  %v107 = vunpack.c.h.bf16 %v28
  %v108 = vunpack.c.l.bf16 %v29
  %v109 = vunpack.c.h.bf16 %v29
  %v110 = vunpack.c.l.bf16 %v30
  %v111 = vunpack.c.h.bf16 %v30
  %v112 = vunpack.c.l.bf16 %v31
  %v113 = vunpack.c.h.bf16 %v31
  %v114 = vunpack.c.l.bf16 %v32
  %v115 = vunpack.c.h.bf16 %v32
  %v116 = vunpack.c.l.bf16 %v33
  %v117 = vunpack.c.h.bf16 %v33
  %v118 = vunpack.c.l.bf16 %v34
  %v119 = vunpack.c.h.bf16 %v34
  %v120 = vunpack.c.l.bf16 %v35
  %v121 = vunpack.c.h.bf16 %v35
  %v122 = vunpack.c.l.bf16 %v36
  %v123 = vunpack.c.h.bf16 %v36
  %v124 = vunpack.c.l.bf16 %v37
  %v125 = vunpack.c.h.bf16 %v37
  %v126 = vunpack.c.l.bf16 %v38
  %v127 = vunpack.c.h.bf16 %v38
  %v128 = vunpack.c.l.bf16 %v39
  %v129 = vunpack.c.h.bf16 %v39
  %v130 = vunpack.c.l.bf16 %v40
  %v131 = vunpack.c.h.bf16 %v40
  %v132 = vunpack.c.l.bf16 %v41
  %v133 = vunpack.c.h.bf16 %v41
  %v134 = vunpack.c.l.bf16 %v42
  %v135 = vunpack.c.h.bf16 %v42
  %v136 = vunpack.c.l.bf16 %v43
  %v137 = vunpack.c.h.bf16 %v43
  %v138 = vunpack.c.l.bf16 %v44
  %v139 = vunpack.c.h.bf16 %v44
  %v140 = vunpack.c.l.bf16 %v45
  %v141 = vunpack.c.h.bf16 %v45
  %v142 = vunpack.c.l.bf16 %v46
  %v143 = vunpack.c.h.bf16 %v46
  %v144 = vunpack.c.l.bf16 %v47
  %v145 = vunpack.c.h.bf16 %v47
  %v146 = vunpack.c.l.bf16 %v48
  %v147 = vunpack.c.h.bf16 %v48
  %v148 = vunpack.c.l.bf16 %v49
  %v149 = vunpack.c.h.bf16 %v49
  %v150 = vunpack.c.l.bf16 %v50
  %v151 = vunpack.c.h.bf16 %v50
  %v152 = vunpack.c.l.bf16 %v51
  %v153 = vunpack.c.h.bf16 %v51
  %v154 = vunpack.c.l.bf16 %v52
  %v155 = vunpack.c.h.bf16 %v52
  %v156 = vunpack.c.l.bf16 %v53
  %v157 = vunpack.c.h.bf16 %v53
  %v158 = vunpack.c.l.bf16 %v54
  %v159 = vunpack.c.h.bf16 %v54
  %v160 = vunpack.c.l.bf16 %v55
  %v161 = vunpack.c.h.bf16 %v55
  %v162 = vunpack.c.l.bf16 %v56
  %v163 = vunpack.c.h.bf16 %v56
  %v164 = vunpack.c.l.bf16 %v57
  %v165 = vunpack.c.h.bf16 %v57
  %v166 = vunpack.c.l.bf16 %v58
  %v167 = vunpack.c.h.bf16 %v58
  %v168 = vunpack.c.l.bf16 %v59
  %v169 = vunpack.c.h.bf16 %v59
  %v170 = vunpack.c.l.bf16 %v60
  %v171 = vunpack.c.h.bf16 %v60
  %v172 = vunpack.c.l.bf16 %v61
  %v173 = vunpack.c.h.bf16 %v61
  %v174 = vunpack.c.l.bf16 %v62
  %v175 = vunpack.c.h.bf16 %v62
  %v176 = vunpack.c.l.bf16 %v63
  %v177 = vunpack.c.h.bf16 %v63
  %v178 = vunpack.c.l.bf16 %v64
  %v179 = vunpack.c.h.bf16 %v64
  %v180 = vunpack.c.l.bf16 %v65
  %v181 = vunpack.c.h.bf16 %v65
  %v182 = vunpack.c.l.bf16 %v66
  %v183 = vunpack.c.h.bf16 %v66
  %v184 = vunpack.c.l.bf16 %v67
  %v185 = vunpack.c.h.bf16 %v67
  %v186 = vunpack.c.l.bf16 %v68
  %v187 = vunpack.c.h.bf16 %v68
  %v188 = vunpack.c.l.bf16 %v69
  %v189 = vunpack.c.h.bf16 %v69
  %v190 = vunpack.c.l.bf16 %v70
  %v191 = vunpack.c.h.bf16 %v70
  %v192 = vunpack.c.l.bf16 %v71
  %v193 = vunpack.c.h.bf16 %v71
  %v194 = vunpack.c.l.bf16 %v72
  %v195 = vunpack.c.h.bf16 %v72
  %v196 = vunpack.c.l.bf16 %v73
  %v197 = vunpack.c.h.bf16 %v73
  %v198 = vunpack.c.l.bf16 %v74
  %v199 = vunpack.c.h.bf16 %v74
  %v200 = vunpack.c.l.bf16 %v75
  %v201 = vunpack.c.h.bf16 %v75
  %v202 = vunpack.c.l.bf16 %v76
  %v203 = vunpack.c.h.bf16 %v76
  %v204 = vunpack.c.l.bf16 %v77
  %v205 = vunpack.c.h.bf16 %v77
  %v206 = vld [vmem:[%s1] sm:$0x3]
  %v208 = vperm.slane %v206, 0
  %v209 = vperm.slane %v206, 1
  %v212 = vmul.f32 %v78, %v208
  %v213 = vmul.f32 %v79, %v209
  %v214 = vmul.f32 %v80, %v208
  %v215 = vmul.f32 %v81, %v209
  %v216 = vmul.f32 %v82, %v208
  %v217 = vmul.f32 %v83, %v209
  %v218 = vmul.f32 %v84, %v208
  %v219 = vmul.f32 %v85, %v209
  %v220 = vmul.f32 %v86, %v208
  %v221 = vmul.f32 %v87, %v209
  %v222 = vmul.f32 %v88, %v208
  %v223 = vmul.f32 %v89, %v209
  %v224 = vmul.f32 %v90, %v208
  %v225 = vmul.f32 %v91, %v209
  %v226 = vmul.f32 %v92, %v208
  %v227 = vmul.f32 %v93, %v209
  %v228 = vmul.f32 %v94, %v208
  %v229 = vmul.f32 %v95, %v209
  %v230 = vmul.f32 %v96, %v208
  %v231 = vmul.f32 %v97, %v209
  %v232 = vmul.f32 %v98, %v208
  %v233 = vmul.f32 %v99, %v209
  %v234 = vmul.f32 %v100, %v208
  %v235 = vmul.f32 %v101, %v209
  %v236 = vmul.f32 %v102, %v208
  %v237 = vmul.f32 %v103, %v209
  %v238 = vmul.f32 %v104, %v208
  %v239 = vmul.f32 %v105, %v209
  %v240 = vmul.f32 %v106, %v208
  %v241 = vmul.f32 %v107, %v209
  %v242 = vmul.f32 %v108, %v208
  %v243 = vmul.f32 %v109, %v209
  %v244 = vmul.f32 %v110, %v208
  %v245 = vmul.f32 %v111, %v209
  %v246 = vmul.f32 %v112, %v208
  %v247 = vmul.f32 %v113, %v209
  %v248 = vmul.f32 %v114, %v208
  %v249 = vmul.f32 %v115, %v209
  %v250 = vmul.f32 %v116, %v208
  %v251 = vmul.f32 %v117, %v209
  %v252 = vmul.f32 %v118, %v208
  %v253 = vmul.f32 %v119, %v209
  %v254 = vmul.f32 %v120, %v208
  %v255 = vmul.f32 %v121, %v209
  %v256 = vmul.f32 %v122, %v208
  %v257 = vmul.f32 %v123, %v209
  %v258 = vmul.f32 %v124, %v208
  %v259 = vmul.f32 %v125, %v209
  %v260 = vmul.f32 %v126, %v208
  %v261 = vmul.f32 %v127, %v209
  %v262 = vmul.f32 %v128, %v208
  %v263 = vmul.f32 %v129, %v209
  %v264 = vmul.f32 %v130, %v208
  %v265 = vmul.f32 %v131, %v209
  %v266 = vmul.f32 %v132, %v208
  %v267 = vmul.f32 %v133, %v209
  %v268 = vmul.f32 %v134, %v208
  %v269 = vmul.f32 %v135, %v209
  %v270 = vmul.f32 %v136, %v208
  %v271 = vmul.f32 %v137, %v209
  %v272 = vmul.f32 %v138, %v208
  %v273 = vmul.f32 %v139, %v209
  %v274 = vmul.f32 %v140, %v208
  %v275 = vmul.f32 %v141, %v209
  %v276 = vmul.f32 %v142, %v208
  %v277 = vmul.f32 %v143, %v209
  %v278 = vmul.f32 %v144, %v208
  %v279 = vmul.f32 %v145, %v209
  %v280 = vmul.f32 %v146, %v208
  %v281 = vmul.f32 %v147, %v209
  %v282 = vmul.f32 %v148, %v208
  %v283 = vmul.f32 %v149, %v209
  %v284 = vmul.f32 %v150, %v208
  %v285 = vmul.f32 %v151, %v209
  %v286 = vmul.f32 %v152, %v208
  %v287 = vmul.f32 %v153, %v209
  %v288 = vmul.f32 %v154, %v208
  %v289 = vmul.f32 %v155, %v209
  %v290 = vmul.f32 %v156, %v208
  %v291 = vmul.f32 %v157, %v209
  %v292 = vmul.f32 %v158, %v208
  %v293 = vmul.f32 %v159, %v209
  %v294 = vmul.f32 %v160, %v208
  %v295 = vmul.f32 %v161, %v209
  %v296 = vmul.f32 %v162, %v208
  %v297 = vmul.f32 %v163, %v209
  %v298 = vmul.f32 %v164, %v208
  %v299 = vmul.f32 %v165, %v209
  %v300 = vmul.f32 %v166, %v208
  %v301 = vmul.f32 %v167, %v209
  %v302 = vmul.f32 %v168, %v208
  %v303 = vmul.f32 %v169, %v209
  %v304 = vmul.f32 %v170, %v208
  %v305 = vmul.f32 %v171, %v209
  %v306 = vmul.f32 %v172, %v208
  %v307 = vmul.f32 %v173, %v209
  %v308 = vmul.f32 %v174, %v208
  %v309 = vmul.f32 %v175, %v209
  %v310 = vmul.f32 %v176, %v208
  %v311 = vmul.f32 %v177, %v209
  %v312 = vmul.f32 %v178, %v208
  %v313 = vmul.f32 %v179, %v209
  %v314 = vmul.f32 %v180, %v208
  %v315 = vmul.f32 %v181, %v209
  %v316 = vmul.f32 %v182, %v208
  %v317 = vmul.f32 %v183, %v209
  %v318 = vmul.f32 %v184, %v208
  %v319 = vmul.f32 %v185, %v209
  %v320 = vmul.f32 %v186, %v208
  %v321 = vmul.f32 %v187, %v209
  %v322 = vmul.f32 %v188, %v208
  %v323 = vmul.f32 %v189, %v209
  %v324 = vmul.f32 %v190, %v208
  %v325 = vmul.f32 %v191, %v209
  %v326 = vmul.f32 %v192, %v208
  %v327 = vmul.f32 %v193, %v209
  %v328 = vmul.f32 %v194, %v208
  %v329 = vmul.f32 %v195, %v209
  %v330 = vmul.f32 %v196, %v208
  %v331 = vmul.f32 %v197, %v209
  %v332 = vmul.f32 %v198, %v208
  %v333 = vmul.f32 %v199, %v209
  %v334 = vmul.f32 %v200, %v208
  %v335 = vmul.f32 %v201, %v209
  %v336 = vmul.f32 %v202, %v208
  %v337 = vmul.f32 %v203, %v209
  %v338 = vmul.f32 %v204, %v208
  %v339 = vmul.f32 %v205, %v209
  %v340 = vld [vmem:[%s2] sm:$0x3]
  %v342 = vperm.slane %v340, 0
  %v343 = vperm.slane %v340, 1
  %v346 = vadd.f32 %v212, %v342
  %v347 = vadd.f32 %v213, %v343
  %v348 = vadd.f32 %v214, %v342
  %v349 = vadd.f32 %v215, %v343
  %v350 = vadd.f32 %v216, %v342
  %v351 = vadd.f32 %v217, %v343
  %v352 = vadd.f32 %v218, %v342
  %v353 = vadd.f32 %v219, %v343
  %v354 = vadd.f32 %v220, %v342
  %v355 = vadd.f32 %v221, %v343
  %v356 = vadd.f32 %v222, %v342
  %v357 = vadd.f32 %v223, %v343
  %v358 = vadd.f32 %v224, %v342
  %v359 = vadd.f32 %v225, %v343
  %v360 = vadd.f32 %v226, %v342
  %v361 = vadd.f32 %v227, %v343
  %v362 = vadd.f32 %v228, %v342
  %v363 = vadd.f32 %v229, %v343
  %v364 = vadd.f32 %v230, %v342
  %v365 = vadd.f32 %v231, %v343
  %v366 = vadd.f32 %v232, %v342
  %v367 = vadd.f32 %v233, %v343
  %v368 = vadd.f32 %v234, %v342
  %v369 = vadd.f32 %v235, %v343
  %v370 = vadd.f32 %v236, %v342
  %v371 = vadd.f32 %v237, %v343
  %v372 = vadd.f32 %v238, %v342
  %v373 = vadd.f32 %v239, %v343
  %v374 = vadd.f32 %v240, %v342
  %v375 = vadd.f32 %v241, %v343
  %v376 = vadd.f32 %v242, %v342
  %v377 = vadd.f32 %v243, %v343
  %v378 = vadd.f32 %v244, %v342
  %v379 = vadd.f32 %v245, %v343
  %v380 = vadd.f32 %v246, %v342
  %v381 = vadd.f32 %v247, %v343
  %v382 = vadd.f32 %v248, %v342
  %v383 = vadd.f32 %v249, %v343
  %v384 = vadd.f32 %v250, %v342
  %v385 = vadd.f32 %v251, %v343
  %v386 = vadd.f32 %v252, %v342
  %v387 = vadd.f32 %v253, %v343
  %v388 = vadd.f32 %v254, %v342
  %v389 = vadd.f32 %v255, %v343
  %v390 = vadd.f32 %v256, %v342
  %v391 = vadd.f32 %v257, %v343
  %v392 = vadd.f32 %v258, %v342
  %v393 = vadd.f32 %v259, %v343
  %v394 = vadd.f32 %v260, %v342
  %v395 = vadd.f32 %v261, %v343
  %v396 = vadd.f32 %v262, %v342
  %v397 = vadd.f32 %v263, %v343
  %v398 = vadd.f32 %v264, %v342
  %v399 = vadd.f32 %v265, %v343
  %v400 = vadd.f32 %v266, %v342
  %v401 = vadd.f32 %v267, %v343
  %v402 = vadd.f32 %v268, %v342
  %v403 = vadd.f32 %v269, %v343
  %v404 = vadd.f32 %v270, %v342
  %v405 = vadd.f32 %v271, %v343
  %v406 = vadd.f32 %v272, %v342
  %v407 = vadd.f32 %v273, %v343
  %v408 = vadd.f32 %v274, %v342
  %v409 = vadd.f32 %v275, %v343
  %v410 = vadd.f32 %v276, %v342
  %v411 = vadd.f32 %v277, %v343
  %v412 = vadd.f32 %v278, %v342
  %v413 = vadd.f32 %v279, %v343
  %v414 = vadd.f32 %v280, %v342
  %v415 = vadd.f32 %v281, %v343
  %v416 = vadd.f32 %v282, %v342
  %v417 = vadd.f32 %v283, %v343
  %v418 = vadd.f32 %v284, %v342
  %v419 = vadd.f32 %v285, %v343
  %v420 = vadd.f32 %v286, %v342
  %v421 = vadd.f32 %v287, %v343
  %v422 = vadd.f32 %v288, %v342
  %v423 = vadd.f32 %v289, %v343
  %v424 = vadd.f32 %v290, %v342
  %v425 = vadd.f32 %v291, %v343
  %v426 = vadd.f32 %v292, %v342
  %v427 = vadd.f32 %v293, %v343
  %v428 = vadd.f32 %v294, %v342
  %v429 = vadd.f32 %v295, %v343
  %v430 = vadd.f32 %v296, %v342
  %v431 = vadd.f32 %v297, %v343
  %v432 = vadd.f32 %v298, %v342
  %v433 = vadd.f32 %v299, %v343
  %v434 = vadd.f32 %v300, %v342
  %v435 = vadd.f32 %v301, %v343
  %v436 = vadd.f32 %v302, %v342
  %v437 = vadd.f32 %v303, %v343
  %v438 = vadd.f32 %v304, %v342
  %v439 = vadd.f32 %v305, %v343
  %v440 = vadd.f32 %v306, %v342
  %v441 = vadd.f32 %v307, %v343
  %v442 = vadd.f32 %v308, %v342
  %v443 = vadd.f32 %v309, %v343
  %v444 = vadd.f32 %v310, %v342
  %v445 = vadd.f32 %v311, %v343
  %v446 = vadd.f32 %v312, %v342
  %v447 = vadd.f32 %v313, %v343
  %v448 = vadd.f32 %v314, %v342
  %v449 = vadd.f32 %v315, %v343
  %v450 = vadd.f32 %v316, %v342
  %v451 = vadd.f32 %v317, %v343
  %v452 = vadd.f32 %v318, %v342
  %v453 = vadd.f32 %v319, %v343
  %v454 = vadd.f32 %v320, %v342
  %v455 = vadd.f32 %v321, %v343
  %v456 = vadd.f32 %v322, %v342
  %v457 = vadd.f32 %v323, %v343
  %v458 = vadd.f32 %v324, %v342
  %v459 = vadd.f32 %v325, %v343
  %v460 = vadd.f32 %v326, %v342
  %v461 = vadd.f32 %v327, %v343
  %v462 = vadd.f32 %v328, %v342
  %v463 = vadd.f32 %v329, %v343
  %v464 = vadd.f32 %v330, %v342
  %v465 = vadd.f32 %v331, %v343
  %v466 = vadd.f32 %v332, %v342
  %v467 = vadd.f32 %v333, %v343
  %v468 = vadd.f32 %v334, %v342
  %v469 = vadd.f32 %v335, %v343
  %v470 = vadd.f32 %v336, %v342
  %v471 = vadd.f32 %v337, %v343
  %v472 = vadd.f32 %v338, %v342
  %v473 = vadd.f32 %v339, %v343
  %v474 = vmax.f32 %v346, 0.0
  %v475 = vmax.f32 %v347, 0.0
  %v476 = vmax.f32 %v348, 0.0
  %v477 = vmax.f32 %v349, 0.0
  %v478 = vmax.f32 %v350, 0.0
  %v479 = vmax.f32 %v351, 0.0
  %v480 = vmax.f32 %v352, 0.0
  %v481 = vmax.f32 %v353, 0.0
  %v482 = vmax.f32 %v354, 0.0
  %v483 = vmax.f32 %v355, 0.0
  %v484 = vmax.f32 %v356, 0.0
  %v485 = vmax.f32 %v357, 0.0
  %v486 = vmax.f32 %v358, 0.0
  %v487 = vmax.f32 %v359, 0.0
  %v488 = vmax.f32 %v360, 0.0
  %v489 = vmax.f32 %v361, 0.0
  %v490 = vmax.f32 %v362, 0.0
  %v491 = vmax.f32 %v363, 0.0
  %v492 = vmax.f32 %v364, 0.0
  %v493 = vmax.f32 %v365, 0.0
  %v494 = vmax.f32 %v366, 0.0
  %v495 = vmax.f32 %v367, 0.0
  %v496 = vmax.f32 %v368, 0.0
  %v497 = vmax.f32 %v369, 0.0
  %v498 = vmax.f32 %v370, 0.0
  %v499 = vmax.f32 %v371, 0.0
  %v500 = vmax.f32 %v372, 0.0
  %v501 = vmax.f32 %v373, 0.0
  %v502 = vmax.f32 %v374, 0.0
  %v503 = vmax.f32 %v375, 0.0
  %v504 = vmax.f32 %v376, 0.0
  %v505 = vmax.f32 %v377, 0.0
  %v506 = vmax.f32 %v378, 0.0
  %v507 = vmax.f32 %v379, 0.0
  %v508 = vmax.f32 %v380, 0.0
  %v509 = vmax.f32 %v381, 0.0
  %v510 = vmax.f32 %v382, 0.0
  %v511 = vmax.f32 %v383, 0.0
  %v512 = vmax.f32 %v384, 0.0
  %v513 = vmax.f32 %v385, 0.0
  %v514 = vmax.f32 %v386, 0.0
  %v515 = vmax.f32 %v387, 0.0
  %v516 = vmax.f32 %v388, 0.0
  %v517 = vmax.f32 %v389, 0.0
  %v518 = vmax.f32 %v390, 0.0
  %v519 = vmax.f32 %v391, 0.0
  %v520 = vmax.f32 %v392, 0.0
  %v521 = vmax.f32 %v393, 0.0
  %v522 = vmax.f32 %v394, 0.0
  %v523 = vmax.f32 %v395, 0.0
  %v524 = vmax.f32 %v396, 0.0
  %v525 = vmax.f32 %v397, 0.0
  %v526 = vmax.f32 %v398, 0.0
  %v527 = vmax.f32 %v399, 0.0
  %v528 = vmax.f32 %v400, 0.0
  %v529 = vmax.f32 %v401, 0.0
  %v530 = vmax.f32 %v402, 0.0
  %v531 = vmax.f32 %v403, 0.0
  %v532 = vmax.f32 %v404, 0.0
  %v533 = vmax.f32 %v405, 0.0
  %v534 = vmax.f32 %v406, 0.0
  %v535 = vmax.f32 %v407, 0.0
  %v536 = vmax.f32 %v408, 0.0
  %v537 = vmax.f32 %v409, 0.0
  %v538 = vmax.f32 %v410, 0.0
  %v539 = vmax.f32 %v411, 0.0
  %v540 = vmax.f32 %v412, 0.0
  %v541 = vmax.f32 %v413, 0.0
  %v542 = vmax.f32 %v414, 0.0
  %v543 = vmax.f32 %v415, 0.0
  %v544 = vmax.f32 %v416, 0.0
  %v545 = vmax.f32 %v417, 0.0
  %v546 = vmax.f32 %v418, 0.0
  %v547 = vmax.f32 %v419, 0.0
  %v548 = vmax.f32 %v420, 0.0
  %v549 = vmax.f32 %v421, 0.0
  %v550 = vmax.f32 %v422, 0.0
  %v551 = vmax.f32 %v423, 0.0
  %v552 = vmax.f32 %v424, 0.0
  %v553 = vmax.f32 %v425, 0.0
  %v554 = vmax.f32 %v426, 0.0
  %v555 = vmax.f32 %v427, 0.0
  %v556 = vmax.f32 %v428, 0.0
  %v557 = vmax.f32 %v429, 0.0
  %v558 = vmax.f32 %v430, 0.0
  %v559 = vmax.f32 %v431, 0.0
  %v560 = vmax.f32 %v432, 0.0
  %v561 = vmax.f32 %v433, 0.0
  %v562 = vmax.f32 %v434, 0.0
  %v563 = vmax.f32 %v435, 0.0
  %v564 = vmax.f32 %v436, 0.0
  %v565 = vmax.f32 %v437, 0.0
  %v566 = vmax.f32 %v438, 0.0
  %v567 = vmax.f32 %v439, 0.0
  %v568 = vmax.f32 %v440, 0.0
  %v569 = vmax.f32 %v441, 0.0
  %v570 = vmax.f32 %v442, 0.0
  %v571 = vmax.f32 %v443, 0.0
  %v572 = vmax.f32 %v444, 0.0
  %v573 = vmax.f32 %v445, 0.0
  %v574 = vmax.f32 %v446, 0.0
  %v575 = vmax.f32 %v447, 0.0
  %v576 = vmax.f32 %v448, 0.0
  %v577 = vmax.f32 %v449, 0.0
  %v578 = vmax.f32 %v450, 0.0
  %v579 = vmax.f32 %v451, 0.0
  %v580 = vmax.f32 %v452, 0.0
  %v581 = vmax.f32 %v453, 0.0
  %v582 = vmax.f32 %v454, 0.0
  %v583 = vmax.f32 %v455, 0.0
  %v584 = vmax.f32 %v456, 0.0
  %v585 = vmax.f32 %v457, 0.0
  %v586 = vmax.f32 %v458, 0.0
  %v587 = vmax.f32 %v459, 0.0
  %v588 = vmax.f32 %v460, 0.0
  %v589 = vmax.f32 %v461, 0.0
  %v590 = vmax.f32 %v462, 0.0
  %v591 = vmax.f32 %v463, 0.0
  %v592 = vmax.f32 %v464, 0.0
  %v593 = vmax.f32 %v465, 0.0
  %v594 = vmax.f32 %v466, 0.0
  %v595 = vmax.f32 %v467, 0.0
  %v596 = vmax.f32 %v468, 0.0
  %v597 = vmax.f32 %v469, 0.0
  %v598 = vmax.f32 %v470, 0.0
  %v599 = vmax.f32 %v471, 0.0
  %v600 = vmax.f32 %v472, 0.0
  %v601 = vmax.f32 %v473, 0.0
  %v602 = vpack.c.bf16 %v475, %v474
  %v603 = vpack.c.bf16 %v477, %v476
  %v604 = vpack.c.bf16 %v479, %v478
  %v605 = vpack.c.bf16 %v481, %v480
  %v606 = vpack.c.bf16 %v483, %v482
  %v607 = vpack.c.bf16 %v485, %v484
  %v608 = vpack.c.bf16 %v487, %v486
  %v609 = vpack.c.bf16 %v489, %v488
  %v610 = vpack.c.bf16 %v491, %v490
  %v611 = vpack.c.bf16 %v493, %v492
  %v612 = vpack.c.bf16 %v495, %v494
  %v613 = vpack.c.bf16 %v497, %v496
  %v614 = vpack.c.bf16 %v499, %v498
  %v615 = vpack.c.bf16 %v501, %v500
  %v616 = vpack.c.bf16 %v503, %v502
  %v617 = vpack.c.bf16 %v505, %v504
  %v618 = vpack.c.bf16 %v507, %v506
  %v619 = vpack.c.bf16 %v509, %v508
  %v620 = vpack.c.bf16 %v511, %v510
  %v621 = vpack.c.bf16 %v513, %v512
  %v622 = vpack.c.bf16 %v515, %v514
  %v623 = vpack.c.bf16 %v517, %v516
  %v624 = vpack.c.bf16 %v519, %v518
  %v625 = vpack.c.bf16 %v521, %v520
  %v626 = vpack.c.bf16 %v523, %v522
  %v627 = vpack.c.bf16 %v525, %v524
  %v628 = vpack.c.bf16 %v527, %v526
  %v629 = vpack.c.bf16 %v529, %v528
  %v630 = vpack.c.bf16 %v531, %v530
  %v631 = vpack.c.bf16 %v533, %v532
  %v632 = vpack.c.bf16 %v535, %v534
  %v633 = vpack.c.bf16 %v537, %v536
  %v634 = vpack.c.bf16 %v539, %v538
  %v635 = vpack.c.bf16 %v541, %v540
  %v636 = vpack.c.bf16 %v543, %v542
  %v637 = vpack.c.bf16 %v545, %v544
  %v638 = vpack.c.bf16 %v547, %v546
  %v639 = vpack.c.bf16 %v549, %v548
  %v640 = vpack.c.bf16 %v551, %v550
  %v641 = vpack.c.bf16 %v553, %v552
  %v642 = vpack.c.bf16 %v555, %v554
  %v643 = vpack.c.bf16 %v557, %v556
  %v644 = vpack.c.bf16 %v559, %v558
  %v645 = vpack.c.bf16 %v561, %v560
  %v646 = vpack.c.bf16 %v563, %v562
  %v647 = vpack.c.bf16 %v565, %v564
  %v648 = vpack.c.bf16 %v567, %v566
  %v649 = vpack.c.bf16 %v569, %v568
  %v650 = vpack.c.bf16 %v571, %v570
  %v651 = vpack.c.bf16 %v573, %v572
  %v652 = vpack.c.bf16 %v575, %v574
  %v653 = vpack.c.bf16 %v577, %v576
  %v654 = vpack.c.bf16 %v579, %v578
  %v655 = vpack.c.bf16 %v581, %v580
  %v656 = vpack.c.bf16 %v583, %v582
  %v657 = vpack.c.bf16 %v585, %v584
  %v658 = vpack.c.bf16 %v587, %v586
  %v659 = vpack.c.bf16 %v589, %v588
  %v660 = vpack.c.bf16 %v591, %v590
  %v661 = vpack.c.bf16 %v593, %v592
  %v662 = vpack.c.bf16 %v595, %v594
  %v663 = vpack.c.bf16 %v597, %v596
  %v664 = vpack.c.bf16 %v599, %v598
  %v665 = vpack.c.bf16 %v601, %v600
  %666 = vst [vmem:[%s3] sm:$0xff] %v602
  %667 = vst [vmem:[%s3 + $0x8] sm:$0xff] %v603
  %668 = vst [vmem:[%s3 + $0x10] sm:$0xff] %v604
  %669 = vst [vmem:[%s3 + $0x18] sm:$0xff] %v605
  %670 = vst [vmem:[%s3 + $0x20] sm:$0xff] %v606
  %671 = vst [vmem:[%s3 + $0x28] sm:$0xff] %v607
  %672 = vst [vmem:[%s3 + $0x30] sm:$0xff] %v608
  %673 = vst [vmem:[%s3 + $0x38] sm:$0xff] %v609
  %674 = vst [vmem:[%s3 + $0x40] sm:$0xff] %v610
  %675 = vst [vmem:[%s3 + $0x48] sm:$0xff] %v611
  %676 = vst [vmem:[%s3 + $0x50] sm:$0xff] %v612
  %677 = vst [vmem:[%s3 + $0x58] sm:$0xff] %v613
  %678 = vst [vmem:[%s3 + $0x60] sm:$0xff] %v614
  %679 = vst [vmem:[%s3 + $0x68] sm:$0xff] %v615
  %680 = vst [vmem:[%s3 + $0x70] sm:$0xff] %v616
  %681 = vst [vmem:[%s3 + $0x78] sm:$0xff] %v617
  %682 = vst [vmem:[%s3 + $0x80] sm:$0xff] %v618
  %683 = vst [vmem:[%s3 + $0x88] sm:$0xff] %v619
  %684 = vst [vmem:[%s3 + $0x90] sm:$0xff] %v620
  %685 = vst [vmem:[%s3 + $0x98] sm:$0xff] %v621
  %686 = vst [vmem:[%s3 + $0xa0] sm:$0xff] %v622
  %687 = vst [vmem:[%s3 + $0xa8] sm:$0xff] %v623
  %688 = vst [vmem:[%s3 + $0xb0] sm:$0xff] %v624
  %689 = vst [vmem:[%s3 + $0xb8] sm:$0xff] %v625
  %690 = vst [vmem:[%s3 + $0xc0] sm:$0xff] %v626
  %691 = vst [vmem:[%s3 + $0xc8] sm:$0xff] %v627
  %692 = vst [vmem:[%s3 + $0xd0] sm:$0xff] %v628
  %693 = vst [vmem:[%s3 + $0xd8] sm:$0xff] %v629
  %694 = vst [vmem:[%s3 + $0xe0] sm:$0xff] %v630
  %695 = vst [vmem:[%s3 + $0xe8] sm:$0xff] %v631
  %696 = vst [vmem:[%s3 + $0xf0] sm:$0xff] %v632
  %697 = vst [vmem:[%s3 + $0xf8] sm:$0xff] %v633
  %698 = vst [vmem:[%s3 + $0x100] sm:$0xff] %v634
  %699 = vst [vmem:[%s3 + $0x108] sm:$0xff] %v635
  %700 = vst [vmem:[%s3 + $0x110] sm:$0xff] %v636
  %701 = vst [vmem:[%s3 + $0x118] sm:$0xff] %v637
  %702 = vst [vmem:[%s3 + $0x120] sm:$0xff] %v638
  %703 = vst [vmem:[%s3 + $0x128] sm:$0xff] %v639
  %704 = vst [vmem:[%s3 + $0x130] sm:$0xff] %v640
  %705 = vst [vmem:[%s3 + $0x138] sm:$0xff] %v641
  %706 = vst [vmem:[%s3 + $0x140] sm:$0xff] %v642
  %707 = vst [vmem:[%s3 + $0x148] sm:$0xff] %v643
  %708 = vst [vmem:[%s3 + $0x150] sm:$0xff] %v644
  %709 = vst [vmem:[%s3 + $0x158] sm:$0xff] %v645
  %710 = vst [vmem:[%s3 + $0x160] sm:$0xff] %v646
  %711 = vst [vmem:[%s3 + $0x168] sm:$0xff] %v647
  %712 = vst [vmem:[%s3 + $0x170] sm:$0xff] %v648
  %713 = vst [vmem:[%s3 + $0x178] sm:$0xff] %v649
  %714 = vst [vmem:[%s3 + $0x180] sm:$0xff] %v650
  %715 = vst [vmem:[%s3 + $0x188] sm:$0xff] %v651
  %716 = vst [vmem:[%s3 + $0x190] sm:$0xff] %v652
  %717 = vst [vmem:[%s3 + $0x198] sm:$0xff] %v653
  %718 = vst [vmem:[%s3 + $0x1a0] sm:$0xff] %v654
  %719 = vst [vmem:[%s3 + $0x1a8] sm:$0xff] %v655
  %720 = vst [vmem:[%s3 + $0x1b0] sm:$0xff] %v656
  %721 = vst [vmem:[%s3 + $0x1b8] sm:$0xff] %v657
  %722 = vst [vmem:[%s3 + $0x1c0] sm:$0xff] %v658
  %723 = vst [vmem:[%s3 + $0x1c8] sm:$0xff] %v659
  %724 = vst [vmem:[%s3 + $0x1d0] sm:$0xff] %v660
  %725 = vst [vmem:[%s3 + $0x1d8] sm:$0xff] %v661
  %726 = vst [vmem:[%s3 + $0x1e0] sm:$0xff] %v662
  %727 = vst [vmem:[%s3 + $0x1e8] sm:$0xff] %v663
  %728 = vst [vmem:[%s3 + $0x1f0] sm:$0xff] %v664
  %729 = vst [vmem:[%s3 + $0x1f8] sm:$0xff] %v665
  // Predicated region
  $region14: #{g_block_forward.3} parent=0 // pred_check
    _
  $region15: #{g_block_forward.3} parent=0 // pred_check_branch
    %731 = sbr.rel (0) target = $region17
  $region16: #{g_block_forward.3} parent=0 // pred_region
    _
  $region17: #{g_block_forward.3} parent=0 // pred_fallthru
    _
  // Predicated region
  $region18: #{g_block_forward.3} parent=0 // pred_check
    _
  $region19: #{g_block_forward.3} parent=0 // pred_check_branch
    %733 = sbr.rel (0) target = $region21
  $region20: #{g_block_forward.3} parent=0 // pred_region
    _
  $region21: #{g_block_forward.3} parent=0 // pred_fallthru
    _

// kernel: g_block_forward.2
$region0: #{g_block_forward.2}
  #allocation0 [shape = 'u32[]', space=smem, size = 0x4, offset = 0x4, fixed_abs, tag = 'smem constant byte address 0x4 - core index']
  #allocation1 [shape = 'u32[72,128]{1,0:T(1,128)}', space=vmem, size = 0x9000, scoped, tag = 'internal scratch']
  %s0 = inlined_call_operand.vmem [shape: bf16[2,18,18,4], index: 0, kind: input, shape index: {}]
  %s1 = inlined_call_operand.vmem [shape: bf16[36,256], index: 1, kind: input, shape index: {}]
  %s2 = inlined_call_operand.vmem [shape: bf16[512,256], index: 2, kind: output, shape index: {0}]
  %s3 = inlined_call_operand.vmem [shape: f32[2,2,256], index: 3, kind: output, shape index: {1}]
  %4 = xla_tuple %s2, %s3
  %s5 = sld [smem:[#allocation0]]
  $region49: #{g_block_forward.2} parent=0
    _
  %s7 = ssub.s32 1, %s5
  %s8 = scalar_select 0, %s7, %s5
  loop: start=0, step=1, limit=4
  $region2: #{g_block_forward.2} parent=0 // loop_pre_header
    _
  $region3: #{g_block_forward.2} parent=0 // loop_header
    %s10 = sphi 0, %s14
    %p11 = scmp.ge.s32.totalorder %s10, 4
    %s20 = sphi 0, %s22
    %s23 = sphi 0, %s20
    %s24 = sphi 0, %s23
    %s40 = sphi 0, %s24
    %s44 = sphi 0, %s44
    %s46 = sphi 0, %s44
    %s47 = sphi 0, %s46
    %s61 = sphi 0, %s47
    %s67 = sphi 0, %s69
    %s70 = sphi 0, %s67
    %s71 = sphi 0, %s70
    %s87 = sphi 0, %s71
    %s93 = sphi 0, %s95
    %s96 = sphi 0, %s93
    %s97 = sphi 0, %s96
    %s113 = sphi 0, %s97
  $region4: #{g_block_forward.2} parent=0 // loop_header_branch
    %13 = sbr.rel (%p11) target = $region8
  $region5: #{g_block_forward.2} parent=0 // loop_body
    %s15 = ssub.s32 %s10, 1
    %s16 = ssub.s32 %s10, 2
    %s17 = sadd.s32 %s10, 1
    %s18 = ssub.s32 %s10, %s17
    %p19 = scmp.eq.s32.totalorder %s18, 0
    %s21 = sadd.s32 %s20, 1
    %s22 = scalar_select %p19, %s20, %s21
    %p25 = pneg %p19
    %p26 = scmp.eq.s32.totalorder %s10, 1
    %p27 = por %p25, %p26
    %p28 = scmp.ne.s32.totalorder %s20, %s23
    %p29 = scmp.eq.s32.totalorder %s10, 0
    %p30 = por %p28, %p29
    %p31 = scmp.ne.s32.totalorder %s20, %s23
    %p32 = scmp.eq.s32.totalorder %s15, 1
    %p33 = por %p31, %p32
    %p34 = scmp.ne.s32.totalorder %s23, %s24
    %p35 = scmp.eq.s32.totalorder %s15, 0
    %p36 = por %p34, %p35
    %p37 = scmp.ne.s32.totalorder %s23, %s24
    %p38 = scmp.eq.s32.totalorder %s16, 1
    %p39 = por %p37, %p38
    %p41 = scmp.ne.s32.totalorder %s24, %s40
    %p42 = scmp.eq.s32.totalorder %s16, 0
    %p43 = por %p41, %p42
    %s45 = sadd.s32 %s44, 1
    %p48 = scmp.eq.s32.totalorder %s10, 1
    %p49 = scmp.ne.s32.totalorder %s44, %s46
    %p50 = scmp.eq.s32.totalorder %s10, 0
    %p51 = por %p49, %p50
    %p52 = scmp.ne.s32.totalorder %s44, %s46
    %p53 = scmp.eq.s32.totalorder %s15, 1
    %p54 = por %p52, %p53
    %p55 = scmp.ne.s32.totalorder %s46, %s47
    %p56 = scmp.eq.s32.totalorder %s15, 0
    %p57 = por %p55, %p56
    %p58 = scmp.ne.s32.totalorder %s46, %s47
    %p59 = scmp.eq.s32.totalorder %s16, 1
    %p60 = por %p58, %p59
    %p62 = scmp.ne.s32.totalorder %s47, %s61
    %p63 = scmp.eq.s32.totalorder %s16, 0
    %p64 = por %p62, %p63
    %s65 = ssub.s32 %s10, %s17
    %p66 = scmp.eq.s32.totalorder %s65, 0
    %s68 = sadd.s32 %s67, 1
    %s69 = scalar_select %p66, %s67, %s68
    %p72 = pneg %p66
    %p73 = scmp.eq.s32.totalorder %s10, 1
    %p74 = por %p72, %p73
    %p75 = scmp.ne.s32.totalorder %s67, %s70
    %p76 = scmp.eq.s32.totalorder %s10, 0
    %p77 = por %p75, %p76
    %p78 = scmp.ne.s32.totalorder %s67, %s70
    %p79 = scmp.eq.s32.totalorder %s15, 1
    %p80 = por %p78, %p79
    %p81 = scmp.ne.s32.totalorder %s70, %s71
    %p82 = scmp.eq.s32.totalorder %s15, 0
    %p83 = por %p81, %p82
    %p84 = scmp.ne.s32.totalorder %s70, %s71
    %p85 = scmp.eq.s32.totalorder %s16, 1
    %p86 = por %p84, %p85
    %p88 = scmp.ne.s32.totalorder %s71, %s87
    %p89 = scmp.eq.s32.totalorder %s16, 0
    %p90 = por %p88, %p89
    %s91 = ssub.s32 %s10, %s17
    %p92 = scmp.eq.s32.totalorder %s91, 0
    %s94 = sadd.s32 %s93, 1
    %s95 = scalar_select %p92, %s93, %s94
    %p98 = pneg %p92
    %p99 = scmp.eq.s32.totalorder %s10, 1
    %p100 = por %p98, %p99
    %p101 = scmp.ne.s32.totalorder %s93, %s96
    %p102 = scmp.eq.s32.totalorder %s10, 0
    %p103 = por %p101, %p102
    %p104 = scmp.ne.s32.totalorder %s93, %s96
    %p105 = scmp.eq.s32.totalorder %s15, 1
    %p106 = por %p104, %p105
    %p107 = scmp.ne.s32.totalorder %s96, %s97
    %p108 = scmp.eq.s32.totalorder %s15, 0
    %p109 = por %p107, %p108
    %p110 = scmp.ne.s32.totalorder %s96, %s97
    %p111 = scmp.eq.s32.totalorder %s16, 1
    %p112 = por %p110, %p111
    %p114 = scmp.ne.s32.totalorder %s97, %s113
    %p115 = scmp.eq.s32.totalorder %s16, 0
    %p116 = por %p114, %p115
    %p117 = scmp.le.s32.totalorder 1, %s10
    %p118 = scmp.lt.s32.totalorder %s10, 3
    %p119 = pnand %p117, %p118
    %p120 = pneg %p119
    // Predicated region
    $region9: #{g_block_forward.2} parent=5 // pred_check
      _
    $region10: #{g_block_forward.2} parent=5 // pred_check_branch
      %122 = sbr.rel (%p119) target = $region12
    $region11: #{g_block_forward.2} parent=5 // pred_region
      %s123 = ssub.s32 %s10, 1
      // Predicated region
      $region13: #{g_block_forward.2} parent=11 // pred_check
        %p124 = pneg %p57
      $region14: #{g_block_forward.2} parent=11 // pred_check_branch
        %126 = sbr.rel (%p124) target = $region16
      $region15: #{g_block_forward.2} parent=11 // pred_region
        _
      $region16: #{g_block_forward.2} parent=11 // pred_fallthru
        _
    $region12: #{g_block_forward.2} parent=5 // pred_fallthru
      _
    %p127 = scmp.lt.s32.totalorder %s10, 2
    // Predicated region
    $region17: #{g_block_forward.2} parent=5 // pred_check
      %p128 = pneg %p127
    $region18: #{g_block_forward.2} parent=5 // pred_check_branch
      %130 = sbr.rel (%p128) target = $region20
    $region19: #{g_block_forward.2} parent=5 // pred_region
      // Predicated region
      $region21: #{g_block_forward.2} parent=19 // pred_check
        %p131 = pneg %p30
      $region22: #{g_block_forward.2} parent=19 // pred_check_branch
        %133 = sbr.rel (%p131) target = $region24
      $region23: #{g_block_forward.2} parent=19 // pred_region
        %p134 = scmp.lt.s32.totalorder %s10, 1
        %s135 = scalar_select %p134, %s10, 1
        %s136 = smul.addr %s135, 54
        %s137 = smul.addr %s136, 4
        %s138 = scalar_lea.vmem %s0, %s137
      $region24: #{g_block_forward.2} parent=19 // pred_fallthru
        _
    $region20: #{g_block_forward.2} parent=5 // pred_fallthru
      _
    %p139 = scmp.le.s32.totalorder 1, %s10
    %p140 = scmp.lt.s32.totalorder %s10, 3
    %p141 = pnand %p139, %p140
    %p142 = pneg %p141
    // Predicated region
    $region25: #{g_block_forward.2} parent=5 // pred_check
      _
    $region26: #{g_block_forward.2} parent=5 // pred_check_branch
      %144 = sbr.rel (%p141) target = $region28
    $region27: #{g_block_forward.2} parent=5 // pred_region
      %s145 = ssub.s32 %s10, 1
      %p146 = scmp.lt.s32.totalorder %s15, 1
      %s147 = scalar_select %p146, %s15, 1
      %s148 = smul.addr %s147, 54
      %s149 = smul.addr %s148, 4
      %s150 = scalar_lea.vmem %s0, %s149
      %p151 = pneg %p36
      %p152 = pneg %p33
      %p153 = pneg %p57
      %p154 = pneg %p54
      %p155 = pneg %p83
      %p156 = pneg %p80
      %s157 = smul.u32 32, %s15
      %p158 = scmp.lt.s32.totalorder %s157, 63
      %s159 = scalar_select %p158, %s157, 63
      %s160 = smul.addr %s159, 2
      %s161 = smul.addr %s160, 4
      %s162 = scalar_lea.vmem %s2, %s161
      %p163 = pneg %p109
      %p164 = pneg %p106
      %p165 = scmp.lt.s32.totalorder %s15, 1
      %s166 = scalar_select %p165, %s15, 1
      %s167 = smul.addr %s166, 2
      %s168 = smul.addr %s167, 2
      %s169 = scalar_lea.vmem %s3, %s168
      %p170 = scmp.lt.s32.totalorder %s15, 1
      %s171 = scalar_select %p170, %s15, 1
      %s172 = smul.addr %s171, 54
      %s173 = smul.addr %s172, 4
      %s174 = scalar_lea.vmem %s0, %s173
      %s175 = smul.u32 32, %s15
      %p176 = scmp.lt.s32.totalorder %s175, 63
      %s177 = scalar_select %p176, %s175, 63
      %s178 = smul.addr %s177, 2
      %s179 = smul.addr %s178, 4
      %s180 = scalar_lea.vmem %s2, %s179
      %s181 = smul.u32 32, %s15
      %p182 = scmp.lt.s32.totalorder %s15, 1
      %s183 = scalar_select %p182, %s15, 1
      %s184 = smul.addr %s183, 2
      %s185 = smul.addr %s184, 2
      %s186 = scalar_lea.vmem %s3, %s185
      %v188 = vld [vmem:[%s174] sm:$0xf]
      %v189 = vld [vmem:[%s174 + $0x4] sm:$0xf]
      %v190 = vld [vmem:[%s174 + $0x8] sm:$0x1]
      %v191 = vld [vmem:[%s174 + $0xc] sm:$0xf]
      %v192 = vld [vmem:[%s174 + $0x10] sm:$0xf]
      %v193 = vld [vmem:[%s174 + $0x14] sm:$0x1]
      %v194 = vld [vmem:[%s174 + $0x18] sm:$0xf]
      %v195 = vld [vmem:[%s174 + $0x1c] sm:$0xf]
      %v196 = vld [vmem:[%s174 + $0x20] sm:$0x1]
      %v197 = vld [vmem:[%s174 + $0x24] sm:$0xf]
      %v198 = vld [vmem:[%s174 + $0x28] sm:$0xf]
      %v199 = vld [vmem:[%s174 + $0x2c] sm:$0x1]
      %v200 = vld [vmem:[%s174 + $0x30] sm:$0xf]
      %v201 = vld [vmem:[%s174 + $0x34] sm:$0xf]
      %v202 = vld [vmem:[%s174 + $0x38] sm:$0x1]
      %v203 = vld [vmem:[%s174 + $0x3c] sm:$0xf]
      %v204 = vld [vmem:[%s174 + $0x40] sm:$0xf]
      %v205 = vld [vmem:[%s174 + $0x44] sm:$0x1]
      %v206 = vld [vmem:[%s174 + $0x48] sm:$0xf]
      %v207 = vld [vmem:[%s174 + $0x4c] sm:$0xf]
      %v208 = vld [vmem:[%s174 + $0x50] sm:$0x1]
      %v209 = vld [vmem:[%s174 + $0x54] sm:$0xf]
      %v210 = vld [vmem:[%s174 + $0x58] sm:$0xf]
      %v211 = vld [vmem:[%s174 + $0x5c] sm:$0x1]
      %v212 = vld [vmem:[%s174 + $0x60] sm:$0xf]
      %v213 = vld [vmem:[%s174 + $0x64] sm:$0xf]
      %v214 = vld [vmem:[%s174 + $0x68] sm:$0x1]
      %v215 = vld [vmem:[%s174 + $0x6c] sm:$0xf]
      %v216 = vld [vmem:[%s174 + $0x70] sm:$0xf]
      %v217 = vld [vmem:[%s174 + $0x74] sm:$0x1]
      %v218 = vld [vmem:[%s174 + $0x78] sm:$0xf]
      %v219 = vld [vmem:[%s174 + $0x7c] sm:$0xf]
      %v220 = vld [vmem:[%s174 + $0x80] sm:$0x1]
      %v221 = vld [vmem:[%s174 + $0x84] sm:$0xf]
      %v222 = vld [vmem:[%s174 + $0x88] sm:$0xf]
      %v223 = vld [vmem:[%s174 + $0x8c] sm:$0x1]
      %v224 = vld [vmem:[%s174 + $0x90] sm:$0xf]
      %v225 = vld [vmem:[%s174 + $0x94] sm:$0xf]
      %v226 = vld [vmem:[%s174 + $0x98] sm:$0x1]
      %v227 = vld [vmem:[%s174 + $0x9c] sm:$0xf]
      %v228 = vld [vmem:[%s174 + $0xa0] sm:$0xf]
      %v229 = vld [vmem:[%s174 + $0xa4] sm:$0x1]
      %v230 = vld [vmem:[%s174 + $0xa8] sm:$0xf]
      %v231 = vld [vmem:[%s174 + $0xac] sm:$0xf]
      %v232 = vld [vmem:[%s174 + $0xb0] sm:$0x1]
      %v233 = vld [vmem:[%s174 + $0xb4] sm:$0xf]
      %v234 = vld [vmem:[%s174 + $0xb8] sm:$0xf]
      %v235 = vld [vmem:[%s174 + $0xbc] sm:$0x1]
      %v236 = vld [vmem:[%s174 + $0xc0] sm:$0xf]
      %v237 = vld [vmem:[%s174 + $0xc4] sm:$0xf]
      %v238 = vld [vmem:[%s174 + $0xc8] sm:$0x1]
      %v239 = vld [vmem:[%s174 + $0xcc] sm:$0xf]
      %v240 = vld [vmem:[%s174 + $0xd0] sm:$0xf]
      %v241 = vld [vmem:[%s174 + $0xd4] sm:$0x1]
      %vm242 = vsmask.f32 3328
      %vm243 = vsmask.f32 7440
      %vm244 = vmor %vm242, %vm243
      %v246 = vshrl.u32 %v188, 16
      %v248 = vrot.slane %v246, 4
      %v249 = vshll.u32 %v188, 16
      %v251 = vrot.slane %v249, 5
      %v252 = vor.u32 %v248, %v251
      %v253 = vrot.slane %v252, 4
      %v255 = vshll.u32 %v189, 16
      %v257 = vrot.slane %v255, 5
      %v258 = vsel %vm244, %v253, %v257
      %v259 = vshrl.u32 %v189, 16
      %v261 = vrot.slane %v259, 4
      %v262 = vor.u32 %v261, %v257
      %v263 = vrot.slane %v262, 4
      %v265 = vshll.u32 %v190, 16
      %v267 = vrot.slane %v265, 5
      %v268 = vsel %vm244, %v263, %v267
      %v270 = vshrl.u32 %v191, 16
      %v272 = vrot.slane %v270, 4
      %v273 = vshll.u32 %v191, 16
      %v275 = vrot.slane %v273, 5
      %v276 = vor.u32 %v272, %v275
      %v277 = vrot.slane %v276, 4
      %v279 = vshll.u32 %v192, 16
      %v281 = vrot.slane %v279, 5
      %v282 = vsel %vm244, %v277, %v281
      %v283 = vshrl.u32 %v192, 16
      %v285 = vrot.slane %v283, 4
      %v286 = vor.u32 %v285, %v281
      %v287 = vrot.slane %v286, 4
      %v289 = vshll.u32 %v193, 16
      %v291 = vrot.slane %v289, 5
      %v292 = vsel %vm244, %v287, %v291
      %v294 = vshrl.u32 %v194, 16
      %v296 = vrot.slane %v294, 4
      %v297 = vshll.u32 %v194, 16
      %v299 = vrot.slane %v297, 5
      %v300 = vor.u32 %v296, %v299
      %v301 = vrot.slane %v300, 4
      %v303 = vshll.u32 %v195, 16
      %v305 = vrot.slane %v303, 5
      %v306 = vsel %vm244, %v301, %v305
      %v307 = vshrl.u32 %v195, 16
      %v309 = vrot.slane %v307, 4
      %v310 = vor.u32 %v309, %v305
      %v311 = vrot.slane %v310, 4
      %v313 = vshll.u32 %v196, 16
      %v315 = vrot.slane %v313, 5
      %v316 = vsel %vm244, %v311, %v315
      %v318 = vshrl.u32 %v197, 16
      %v320 = vrot.slane %v318, 4
      %v321 = vshll.u32 %v197, 16
      %v323 = vrot.slane %v321, 5
      %v324 = vor.u32 %v320, %v323
      %v325 = vrot.slane %v324, 4
      %v327 = vshll.u32 %v198, 16
      %v329 = vrot.slane %v327, 5
      %v330 = vsel %vm244, %v325, %v329
      %v331 = vshrl.u32 %v198, 16
      %v333 = vrot.slane %v331, 4
      %v334 = vor.u32 %v333, %v329
      %v335 = vrot.slane %v334, 4
      %v337 = vshll.u32 %v199, 16
      %v339 = vrot.slane %v337, 5
      %v340 = vsel %vm244, %v335, %v339
      %v342 = vshrl.u32 %v200, 16
      %v344 = vrot.slane %v342, 4
      %v345 = vshll.u32 %v200, 16
      %v347 = vrot.slane %v345, 5
      %v348 = vor.u32 %v344, %v347
      %v349 = vrot.slane %v348, 4
      %v351 = vshll.u32 %v201, 16
      %v353 = vrot.slane %v351, 5
      %v354 = vsel %vm244, %v349, %v353
      %v355 = vshrl.u32 %v201, 16
      %v357 = vrot.slane %v355, 4
      %v358 = vor.u32 %v357, %v353
      %v359 = vrot.slane %v358, 4
      %v361 = vshll.u32 %v202, 16
      %v363 = vrot.slane %v361, 5
      %v364 = vsel %vm244, %v359, %v363
      %v366 = vshrl.u32 %v203, 16
      %v368 = vrot.slane %v366, 4
      %v369 = vshll.u32 %v203, 16
      %v371 = vrot.slane %v369, 5
      %v372 = vor.u32 %v368, %v371
      %v373 = vrot.slane %v372, 4
      %v375 = vshll.u32 %v204, 16
      %v377 = vrot.slane %v375, 5
      %v378 = vsel %vm244, %v373, %v377
      %v379 = vshrl.u32 %v204, 16
      %v381 = vrot.slane %v379, 4
      %v382 = vor.u32 %v381, %v377
      %v383 = vrot.slane %v382, 4
      %v385 = vshll.u32 %v205, 16
      %v387 = vrot.slane %v385, 5
      %v388 = vsel %vm244, %v383, %v387
      %v390 = vshrl.u32 %v206, 16
      %v392 = vrot.slane %v390, 4
      %v393 = vshll.u32 %v206, 16
      %v395 = vrot.slane %v393, 5
      %v396 = vor.u32 %v392, %v395
      %v397 = vrot.slane %v396, 4
      %v399 = vshll.u32 %v207, 16
      %v401 = vrot.slane %v399, 5
      %v402 = vsel %vm244, %v397, %v401
      %v403 = vshrl.u32 %v207, 16
      %v405 = vrot.slane %v403, 4
      %v406 = vor.u32 %v405, %v401
      %v407 = vrot.slane %v406, 4
      %v409 = vshll.u32 %v208, 16
      %v411 = vrot.slane %v409, 5
      %v412 = vsel %vm244, %v407, %v411
      %v414 = vshrl.u32 %v209, 16
      %v416 = vrot.slane %v414, 4
      %v417 = vshll.u32 %v209, 16
      %v419 = vrot.slane %v417, 5
      %v420 = vor.u32 %v416, %v419
      %v421 = vrot.slane %v420, 4
      %v423 = vshll.u32 %v210, 16
      %v425 = vrot.slane %v423, 5
      %v426 = vsel %vm244, %v421, %v425
      %v427 = vshrl.u32 %v210, 16
      %v429 = vrot.slane %v427, 4
      %v430 = vor.u32 %v429, %v425
      %v431 = vrot.slane %v430, 4
      %v433 = vshll.u32 %v211, 16
      %v435 = vrot.slane %v433, 5
      %v436 = vsel %vm244, %v431, %v435
      %v438 = vshrl.u32 %v212, 16
      %v440 = vrot.slane %v438, 4
      %v441 = vshll.u32 %v212, 16
      %v443 = vrot.slane %v441, 5
      %v444 = vor.u32 %v440, %v443
      %v445 = vrot.slane %v444, 4
      %v447 = vshll.u32 %v213, 16
      %v449 = vrot.slane %v447, 5
      %v450 = vsel %vm244, %v445, %v449
      %v451 = vshrl.u32 %v213, 16
      %v453 = vrot.slane %v451, 4
      %v454 = vor.u32 %v453, %v449
      %v455 = vrot.slane %v454, 4
      %v457 = vshll.u32 %v214, 16
      %v459 = vrot.slane %v457, 5
      %v460 = vsel %vm244, %v455, %v459
      %v462 = vshrl.u32 %v215, 16
      %v464 = vrot.slane %v462, 4
      %v465 = vshll.u32 %v215, 16
      %v467 = vrot.slane %v465, 5
      %v468 = vor.u32 %v464, %v467
      %v469 = vrot.slane %v468, 4
      %v471 = vshll.u32 %v216, 16
      %v473 = vrot.slane %v471, 5
      %v474 = vsel %vm244, %v469, %v473
      %v475 = vshrl.u32 %v216, 16
      %v477 = vrot.slane %v475, 4
      %v478 = vor.u32 %v477, %v473
      %v479 = vrot.slane %v478, 4
      %v481 = vshll.u32 %v217, 16
      %v483 = vrot.slane %v481, 5
      %v484 = vsel %vm244, %v479, %v483
      %v486 = vshrl.u32 %v218, 16
      %v488 = vrot.slane %v486, 4
      %v489 = vshll.u32 %v218, 16
      %v491 = vrot.slane %v489, 5
      %v492 = vor.u32 %v488, %v491
      %v493 = vrot.slane %v492, 4
      %v495 = vshll.u32 %v219, 16
      %v497 = vrot.slane %v495, 5
      %v498 = vsel %vm244, %v493, %v497
      %v499 = vshrl.u32 %v219, 16
      %v501 = vrot.slane %v499, 4
      %v502 = vor.u32 %v501, %v497
      %v503 = vrot.slane %v502, 4
      %v505 = vshll.u32 %v220, 16
      %v507 = vrot.slane %v505, 5
      %v508 = vsel %vm244, %v503, %v507
      %v510 = vshrl.u32 %v221, 16
      %v512 = vrot.slane %v510, 4
      %v513 = vshll.u32 %v221, 16
      %v515 = vrot.slane %v513, 5
      %v516 = vor.u32 %v512, %v515
      %v517 = vrot.slane %v516, 4
      %v519 = vshll.u32 %v222, 16
      %v521 = vrot.slane %v519, 5
      %v522 = vsel %vm244, %v517, %v521
      %v523 = vshrl.u32 %v222, 16
      %v525 = vrot.slane %v523, 4
      %v526 = vor.u32 %v525, %v521
      %v527 = vrot.slane %v526, 4
      %v529 = vshll.u32 %v223, 16
      %v531 = vrot.slane %v529, 5
      %v532 = vsel %vm244, %v527, %v531
      %v534 = vshrl.u32 %v224, 16
      %v536 = vrot.slane %v534, 4
      %v537 = vshll.u32 %v224, 16
      %v539 = vrot.slane %v537, 5
      %v540 = vor.u32 %v536, %v539
      %v541 = vrot.slane %v540, 4
      %v543 = vshll.u32 %v225, 16
      %v545 = vrot.slane %v543, 5
      %v546 = vsel %vm244, %v541, %v545
      %v547 = vshrl.u32 %v225, 16
      %v549 = vrot.slane %v547, 4
      %v550 = vor.u32 %v549, %v545
      %v551 = vrot.slane %v550, 4
      %v553 = vshll.u32 %v226, 16
      %v555 = vrot.slane %v553, 5
      %v556 = vsel %vm244, %v551, %v555
      %v558 = vshrl.u32 %v227, 16
      %v560 = vrot.slane %v558, 4
      %v561 = vshll.u32 %v227, 16
      %v563 = vrot.slane %v561, 5
      %v564 = vor.u32 %v560, %v563
      %v565 = vrot.slane %v564, 4
      %v567 = vshll.u32 %v228, 16
      %v569 = vrot.slane %v567, 5
      %v570 = vsel %vm244, %v565, %v569
      %v571 = vshrl.u32 %v228, 16
      %v573 = vrot.slane %v571, 4
      %v574 = vor.u32 %v573, %v569
      %v575 = vrot.slane %v574, 4
      %v577 = vshll.u32 %v229, 16
      %v579 = vrot.slane %v577, 5
      %v580 = vsel %vm244, %v575, %v579
      %v582 = vshrl.u32 %v230, 16
      %v584 = vrot.slane %v582, 4
      %v585 = vshll.u32 %v230, 16
      %v587 = vrot.slane %v585, 5
      %v588 = vor.u32 %v584, %v587
      %v589 = vrot.slane %v588, 4
      %v591 = vshll.u32 %v231, 16
      %v593 = vrot.slane %v591, 5
      %v594 = vsel %vm244, %v589, %v593
      %v595 = vshrl.u32 %v231, 16
      %v597 = vrot.slane %v595, 4
      %v598 = vor.u32 %v597, %v593
      %v599 = vrot.slane %v598, 4
      %v601 = vshll.u32 %v232, 16
      %v603 = vrot.slane %v601, 5
      %v604 = vsel %vm244, %v599, %v603
      %v606 = vshrl.u32 %v233, 16
      %v608 = vrot.slane %v606, 4
      %v609 = vshll.u32 %v233, 16
      %v611 = vrot.slane %v609, 5
      %v612 = vor.u32 %v608, %v611
      %v613 = vrot.slane %v612, 4
      %v615 = vshll.u32 %v234, 16
      %v617 = vrot.slane %v615, 5
      %v618 = vsel %vm244, %v613, %v617
      %v619 = vshrl.u32 %v234, 16
      %v621 = vrot.slane %v619, 4
      %v622 = vor.u32 %v621, %v617
      %v623 = vrot.slane %v622, 4
      %v625 = vshll.u32 %v235, 16
      %v627 = vrot.slane %v625, 5
      %v628 = vsel %vm244, %v623, %v627
      %vm677 = vcmask 1042432
      %vm678 = vcmask 1046532
      %vm679 = vmor %vm677, %vm678
      %v680 = vrot.slane %v188, 5
      %v681 = vrot.slane %v680, 4
      %v682 = vrot.slane %v189, 5
      %v683 = vsel %vm679, %v681, %v682
      %v684 = vrot.slane %v682, 4
      %v685 = vrot.slane %v190, 5
      %v686 = vsel %vm679, %v684, %v685
      %v687 = vrot.slane %v191, 5
      %v688 = vrot.slane %v687, 4
      %v689 = vrot.slane %v192, 5
      %v690 = vsel %vm679, %v688, %v689
      %v691 = vrot.slane %v689, 4
      %v692 = vrot.slane %v193, 5
      %v693 = vsel %vm679, %v691, %v692
      %v694 = vrot.slane %v194, 5
      %v695 = vrot.slane %v694, 4
      %v696 = vrot.slane %v195, 5
      %v697 = vsel %vm679, %v695, %v696
      %v698 = vrot.slane %v696, 4
      %v699 = vrot.slane %v196, 5
      %v700 = vsel %vm679, %v698, %v699
      %v701 = vrot.slane %v197, 5
      %v702 = vrot.slane %v701, 4
      %v703 = vrot.slane %v198, 5
      %v704 = vsel %vm679, %v702, %v703
      %v705 = vrot.slane %v703, 4
      %v706 = vrot.slane %v199, 5
      %v707 = vsel %vm679, %v705, %v706
      %v708 = vrot.slane %v200, 5
      %v709 = vrot.slane %v708, 4
      %v710 = vrot.slane %v201, 5
      %v711 = vsel %vm679, %v709, %v710
      %v712 = vrot.slane %v710, 4
      %v713 = vrot.slane %v202, 5
      %v714 = vsel %vm679, %v712, %v713
      %v715 = vrot.slane %v203, 5
      %v716 = vrot.slane %v715, 4
      %v717 = vrot.slane %v204, 5
      %v718 = vsel %vm679, %v716, %v717
      %v719 = vrot.slane %v717, 4
      %v720 = vrot.slane %v205, 5
      %v721 = vsel %vm679, %v719, %v720
      %v722 = vrot.slane %v206, 5
      %v723 = vrot.slane %v722, 4
      %v724 = vrot.slane %v207, 5
      %v725 = vsel %vm679, %v723, %v724
      %v726 = vrot.slane %v724, 4
      %v727 = vrot.slane %v208, 5
      %v728 = vsel %vm679, %v726, %v727
      %v729 = vrot.slane %v209, 5
      %v730 = vrot.slane %v729, 4
      %v731 = vrot.slane %v210, 5
      %v732 = vsel %vm679, %v730, %v731
      %v733 = vrot.slane %v731, 4
      %v734 = vrot.slane %v211, 5
      %v735 = vsel %vm679, %v733, %v734
      %v736 = vrot.slane %v212, 5
      %v737 = vrot.slane %v736, 4
      %v738 = vrot.slane %v213, 5
      %v739 = vsel %vm679, %v737, %v738
      %v740 = vrot.slane %v738, 4
      %v741 = vrot.slane %v214, 5
      %v742 = vsel %vm679, %v740, %v741
      %v743 = vrot.slane %v215, 5
      %v744 = vrot.slane %v743, 4
      %v745 = vrot.slane %v216, 5
      %v746 = vsel %vm679, %v744, %v745
      %v747 = vrot.slane %v745, 4
      %v748 = vrot.slane %v217, 5
      %v749 = vsel %vm679, %v747, %v748
      %v750 = vrot.slane %v218, 5
      %v751 = vrot.slane %v750, 4
      %v752 = vrot.slane %v219, 5
      %v753 = vsel %vm679, %v751, %v752
      %v754 = vrot.slane %v752, 4
      %v755 = vrot.slane %v220, 5
      %v756 = vsel %vm679, %v754, %v755
      %v757 = vrot.slane %v221, 5
      %v758 = vrot.slane %v757, 4
      %v759 = vrot.slane %v222, 5
      %v760 = vsel %vm679, %v758, %v759
      %v761 = vrot.slane %v759, 4
      %v762 = vrot.slane %v223, 5
      %v763 = vsel %vm679, %v761, %v762
      %v764 = vrot.slane %v224, 5
      %v765 = vrot.slane %v764, 4
      %v766 = vrot.slane %v225, 5
      %v767 = vsel %vm679, %v765, %v766
      %v768 = vrot.slane %v766, 4
      %v769 = vrot.slane %v226, 5
      %v770 = vsel %vm679, %v768, %v769
      %v771 = vrot.slane %v227, 5
      %v772 = vrot.slane %v771, 4
      %v773 = vrot.slane %v228, 5
      %v774 = vsel %vm679, %v772, %v773
      %v775 = vrot.slane %v773, 4
      %v776 = vrot.slane %v229, 5
      %v777 = vsel %vm679, %v775, %v776
      %v778 = vrot.slane %v230, 5
      %v779 = vrot.slane %v778, 4
      %v780 = vrot.slane %v231, 5
      %v781 = vsel %vm679, %v779, %v780
      %v782 = vrot.slane %v780, 4
      %v783 = vrot.slane %v232, 5
      %v784 = vsel %vm679, %v782, %v783
      %v785 = vrot.slane %v233, 5
      %v786 = vrot.slane %v785, 4
      %v787 = vrot.slane %v234, 5
      %v788 = vsel %vm679, %v786, %v787
      %v789 = vrot.slane %v787, 4
      %v790 = vrot.slane %v235, 5
      %v791 = vsel %vm679, %v789, %v790
      %v793 = vshrl.u32 %v236, 16
      %v795 = vrot.slane %v793, 4
      %v796 = vshll.u32 %v236, 16
      %v798 = vrot.slane %v796, 5
      %v799 = vor.u32 %v795, %v798
      %v800 = vrot.slane %v799, 4
      %v802 = vshll.u32 %v237, 16
      %v804 = vrot.slane %v802, 5
      %v805 = vsel %vm244, %v800, %v804
      %v806 = vshrl.u32 %v237, 16
      %v808 = vrot.slane %v806, 4
      %v809 = vor.u32 %v808, %v804
      %v810 = vrot.slane %v809, 4
      %v812 = vshll.u32 %v238, 16
      %v814 = vrot.slane %v812, 5
      %v815 = vsel %vm244, %v810, %v814
      %v819 = vrot.slane %v236, 5
      %v820 = vrot.slane %v819, 4
      %v821 = vrot.slane %v237, 5
      %v822 = vsel %vm679, %v820, %v821
      %v823 = vrot.slane %v821, 4
      %v824 = vrot.slane %v238, 5
      %v825 = vsel %vm679, %v823, %v824
      %v827 = vshrl.u32 %v239, 16
      %v829 = vrot.slane %v827, 4
      %v830 = vshll.u32 %v239, 16
      %v832 = vrot.slane %v830, 5
      %v833 = vor.u32 %v829, %v832
      %v834 = vrot.slane %v833, 4
      %v836 = vshll.u32 %v240, 16
      %v838 = vrot.slane %v836, 5
      %v839 = vsel %vm244, %v834, %v838
      %v840 = vshrl.u32 %v240, 16
      %v842 = vrot.slane %v840, 4
      %v843 = vor.u32 %v842, %v838
      %v844 = vrot.slane %v843, 4
      %v846 = vshll.u32 %v241, 16
      %v848 = vrot.slane %v846, 5
      %v849 = vsel %vm244, %v844, %v848
      %v853 = vrot.slane %v239, 5
      %v854 = vrot.slane %v853, 4
      %v855 = vrot.slane %v240, 5
      %v856 = vsel %vm679, %v854, %v855
      %v857 = vrot.slane %v855, 4
      %v858 = vrot.slane %v241, 5
      %v859 = vsel %vm679, %v857, %v858
      %v860 = vunpack.c.l.b16 %v188
      %v861 = vunpack.c.l.b16 %v189
      %v862 = vunpack.c.l.b16 %v191
      %v863 = vunpack.c.l.b16 %v192
      %v864 = vunpack.c.l.b16 %v194
      %v865 = vunpack.c.l.b16 %v195
      %v866 = vunpack.c.l.b16 %v197
      %v867 = vunpack.c.l.b16 %v198
      %v868 = vunpack.c.l.b16 %v200
      %v869 = vunpack.c.l.b16 %v201
      %v870 = vunpack.c.l.b16 %v203
      %v871 = vunpack.c.l.b16 %v204
      %v872 = vunpack.c.l.b16 %v206
      %v873 = vunpack.c.l.b16 %v207
      %v874 = vunpack.c.l.b16 %v209
      %v875 = vunpack.c.l.b16 %v210
      %v876 = vunpack.c.l.b16 %v212
      %v877 = vunpack.c.l.b16 %v213
      %v878 = vunpack.c.l.b16 %v215
      %v879 = vunpack.c.l.b16 %v216
      %v880 = vunpack.c.l.b16 %v218
      %v881 = vunpack.c.l.b16 %v219
      %v882 = vunpack.c.l.b16 %v221
      %v883 = vunpack.c.l.b16 %v222
      %v884 = vunpack.c.l.b16 %v224
      %v885 = vunpack.c.l.b16 %v225
      %v886 = vunpack.c.l.b16 %v227
      %v887 = vunpack.c.l.b16 %v228
      %v888 = vunpack.c.l.b16 %v230
      %v889 = vunpack.c.l.b16 %v231
      %v890 = vunpack.c.l.b16 %v233
      %v891 = vunpack.c.l.b16 %v234
      %v892 = vpack.c.b16 %v861, %v860
      %v893 = vpack.c.b16 %v863, %v862
      %v894 = vpack.c.b16 %v865, %v864
      %v895 = vpack.c.b16 %v867, %v866
      %v896 = vpack.c.b16 %v869, %v868
      %v897 = vpack.c.b16 %v871, %v870
      %v898 = vpack.c.b16 %v873, %v872
      %v899 = vpack.c.b16 %v875, %v874
      %v900 = vpack.c.b16 %v877, %v876
      %v901 = vpack.c.b16 %v879, %v878
      %v902 = vpack.c.b16 %v881, %v880
      %v903 = vpack.c.b16 %v883, %v882
      %v904 = vpack.c.b16 %v885, %v884
      %v905 = vpack.c.b16 %v887, %v886
      %v906 = vpack.c.b16 %v889, %v888
      %v907 = vpack.c.b16 %v891, %v890
      %v908 = vunpack.c.l.b16 %v258
      %v909 = vunpack.c.l.b16 %v268
      %v910 = vunpack.c.l.b16 %v282
      %v911 = vunpack.c.l.b16 %v292
      %v912 = vunpack.c.l.b16 %v306
      %v913 = vunpack.c.l.b16 %v316
      %v914 = vunpack.c.l.b16 %v330
      %v915 = vunpack.c.l.b16 %v340
      %v916 = vunpack.c.l.b16 %v354
      %v917 = vunpack.c.l.b16 %v364
      %v918 = vunpack.c.l.b16 %v378
      %v919 = vunpack.c.l.b16 %v388
      %v920 = vunpack.c.l.b16 %v402
      %v921 = vunpack.c.l.b16 %v412
      %v922 = vunpack.c.l.b16 %v426
      %v923 = vunpack.c.l.b16 %v436
      %v924 = vunpack.c.l.b16 %v450
      %v925 = vunpack.c.l.b16 %v460
      %v926 = vunpack.c.l.b16 %v474
      %v927 = vunpack.c.l.b16 %v484
      %v928 = vunpack.c.l.b16 %v498
      %v929 = vunpack.c.l.b16 %v508
      %v930 = vunpack.c.l.b16 %v522
      %v931 = vunpack.c.l.b16 %v532
      %v932 = vunpack.c.l.b16 %v546
      %v933 = vunpack.c.l.b16 %v556
      %v934 = vunpack.c.l.b16 %v570
      %v935 = vunpack.c.l.b16 %v580
      %v936 = vunpack.c.l.b16 %v594
      %v937 = vunpack.c.l.b16 %v604
      %v938 = vunpack.c.l.b16 %v618
      %v939 = vunpack.c.l.b16 %v628
      %v940 = vpack.c.b16 %v909, %v908
      %v941 = vpack.c.b16 %v911, %v910
      %v942 = vpack.c.b16 %v913, %v912
      %v943 = vpack.c.b16 %v915, %v914
      %v944 = vpack.c.b16 %v917, %v916
      %v945 = vpack.c.b16 %v919, %v918
      %v946 = vpack.c.b16 %v921, %v920
      %v947 = vpack.c.b16 %v923, %v922
      %v948 = vpack.c.b16 %v925, %v924
      %v949 = vpack.c.b16 %v927, %v926
      %v950 = vpack.c.b16 %v929, %v928
      %v951 = vpack.c.b16 %v931, %v930
      %v952 = vpack.c.b16 %v933, %v932
      %v953 = vpack.c.b16 %v935, %v934
      %v954 = vpack.c.b16 %v937, %v936
      %v955 = vpack.c.b16 %v939, %v938
      %956 = vrot.lane.b32.xlu0 %v940, 4
      %v957 = vpop.permute.xlu0 %956
      %958 = vrot.lane.b32.xlu0 %v941, 4
      %v959 = vpop.permute.xlu0 %958
      %960 = vrot.lane.b32.xlu0 %v942, 4
      %v961 = vpop.permute.xlu0 %960
      %962 = vrot.lane.b32.xlu0 %v943, 4
      %v963 = vpop.permute.xlu0 %962
      %964 = vrot.lane.b32.xlu0 %v944, 4
      %v965 = vpop.permute.xlu0 %964
      %966 = vrot.lane.b32.xlu0 %v945, 4
      %v967 = vpop.permute.xlu0 %966
      %968 = vrot.lane.b32.xlu0 %v946, 4
      %v969 = vpop.permute.xlu0 %968
      %970 = vrot.lane.b32.xlu0 %v947, 4
      %v971 = vpop.permute.xlu0 %970
      %972 = vrot.lane.b32.xlu0 %v948, 4
      %v973 = vpop.permute.xlu0 %972
      %974 = vrot.lane.b32.xlu0 %v949, 4
      %v975 = vpop.permute.xlu0 %974
      %976 = vrot.lane.b32.xlu0 %v950, 4
      %v977 = vpop.permute.xlu0 %976
      %978 = vrot.lane.b32.xlu0 %v951, 4
      %v979 = vpop.permute.xlu0 %978
      %980 = vrot.lane.b32.xlu0 %v952, 4
      %v981 = vpop.permute.xlu0 %980
      %982 = vrot.lane.b32.xlu0 %v953, 4
      %v983 = vpop.permute.xlu0 %982
      %984 = vrot.lane.b32.xlu0 %v954, 4
      %v985 = vpop.permute.xlu0 %984
      %986 = vrot.lane.b32.xlu0 %v955, 4
      %v987 = vpop.permute.xlu0 %986
      %v988 = vunpack.c.l.b16 %v683
      %v989 = vunpack.c.l.b16 %v686
      %v990 = vunpack.c.l.b16 %v690
      %v991 = vunpack.c.l.b16 %v693
      %v992 = vunpack.c.l.b16 %v697
      %v993 = vunpack.c.l.b16 %v700
      %v994 = vunpack.c.l.b16 %v704
      %v995 = vunpack.c.l.b16 %v707
      %v996 = vunpack.c.l.b16 %v711
      %v997 = vunpack.c.l.b16 %v714
      %v998 = vunpack.c.l.b16 %v718
      %v999 = vunpack.c.l.b16 %v721
      %v1000 = vunpack.c.l.b16 %v725
      %v1001 = vunpack.c.l.b16 %v728
      %v1002 = vunpack.c.l.b16 %v732
      %v1003 = vunpack.c.l.b16 %v735
      %v1004 = vunpack.c.l.b16 %v739
      %v1005 = vunpack.c.l.b16 %v742
      %v1006 = vunpack.c.l.b16 %v746
      %v1007 = vunpack.c.l.b16 %v749
      %v1008 = vunpack.c.l.b16 %v753
      %v1009 = vunpack.c.l.b16 %v756
      %v1010 = vunpack.c.l.b16 %v760
      %v1011 = vunpack.c.l.b16 %v763
      %v1012 = vunpack.c.l.b16 %v767
      %v1013 = vunpack.c.l.b16 %v770
      %v1014 = vunpack.c.l.b16 %v774
      %v1015 = vunpack.c.l.b16 %v777
      %v1016 = vunpack.c.l.b16 %v781
      %v1017 = vunpack.c.l.b16 %v784
      %v1018 = vunpack.c.l.b16 %v788
      %v1019 = vunpack.c.l.b16 %v791
      %v1020 = vpack.c.b16 %v989, %v988
      %v1021 = vpack.c.b16 %v991, %v990
      %v1022 = vpack.c.b16 %v993, %v992
      %v1023 = vpack.c.b16 %v995, %v994
      %v1024 = vpack.c.b16 %v997, %v996
      %v1025 = vpack.c.b16 %v999, %v998
      %v1026 = vpack.c.b16 %v1001, %v1000
      %v1027 = vpack.c.b16 %v1003, %v1002
      %v1028 = vpack.c.b16 %v1005, %v1004
      %v1029 = vpack.c.b16 %v1007, %v1006
      %v1030 = vpack.c.b16 %v1009, %v1008
      %v1031 = vpack.c.b16 %v1011, %v1010
      %v1032 = vpack.c.b16 %v1013, %v1012
      %v1033 = vpack.c.b16 %v1015, %v1014
      %v1034 = vpack.c.b16 %v1017, %v1016
      %v1035 = vpack.c.b16 %v1019, %v1018
      %1036 = vrot.lane.b32.xlu0 %v1020, 8
      %v1037 = vpop.permute.xlu0 %1036
      %1038 = vrot.lane.b32.xlu0 %v1021, 8
      %v1039 = vpop.permute.xlu0 %1038
      %1040 = vrot.lane.b32.xlu0 %v1022, 8
      %v1041 = vpop.permute.xlu0 %1040
      %1042 = vrot.lane.b32.xlu0 %v1023, 8
      %v1043 = vpop.permute.xlu0 %1042
      %1044 = vrot.lane.b32.xlu0 %v1024, 8
      %v1045 = vpop.permute.xlu0 %1044
      %1046 = vrot.lane.b32.xlu0 %v1025, 8
      %v1047 = vpop.permute.xlu0 %1046
      %1048 = vrot.lane.b32.xlu0 %v1026, 8
      %v1049 = vpop.permute.xlu0 %1048
      %1050 = vrot.lane.b32.xlu0 %v1027, 8
      %v1051 = vpop.permute.xlu0 %1050
      %1052 = vrot.lane.b32.xlu0 %v1028, 8
      %v1053 = vpop.permute.xlu0 %1052
      %1054 = vrot.lane.b32.xlu0 %v1029, 8
      %v1055 = vpop.permute.xlu0 %1054
      %1056 = vrot.lane.b32.xlu0 %v1030, 8
      %v1057 = vpop.permute.xlu0 %1056
      %1058 = vrot.lane.b32.xlu0 %v1031, 8
      %v1059 = vpop.permute.xlu0 %1058
      %1060 = vrot.lane.b32.xlu0 %v1032, 8
      %v1061 = vpop.permute.xlu0 %1060
      %1062 = vrot.lane.b32.xlu0 %v1033, 8
      %v1063 = vpop.permute.xlu0 %1062
      %1064 = vrot.lane.b32.xlu0 %v1034, 8
      %v1065 = vpop.permute.xlu0 %1064
      %1066 = vrot.lane.b32.xlu0 %v1035, 8
      %v1067 = vpop.permute.xlu0 %1066
      %v1068 = vunpack.c.l.b16 %v236
      %v1069 = vunpack.c.l.b16 %v237
      %v1070 = vpack.c.b16 %v1069, %v1068
      %1071 = vrot.lane.b32.xlu0 %v893, 12
      %v1072 = vpop.permute.xlu0 %1071
      %1073 = vrot.lane.b32.xlu0 %v894, 12
      %v1074 = vpop.permute.xlu0 %1073
      %1075 = vrot.lane.b32.xlu0 %v895, 12
      %v1076 = vpop.permute.xlu0 %1075
      %1077 = vrot.lane.b32.xlu0 %v896, 12
      %v1078 = vpop.permute.xlu0 %1077
      %1079 = vrot.lane.b32.xlu0 %v897, 12
      %v1080 = vpop.permute.xlu0 %1079
      %1081 = vrot.lane.b32.xlu0 %v898, 12
      %v1082 = vpop.permute.xlu0 %1081
      %1083 = vrot.lane.b32.xlu0 %v899, 12
      %v1084 = vpop.permute.xlu0 %1083
      %1085 = vrot.lane.b32.xlu0 %v900, 12
      %v1086 = vpop.permute.xlu0 %1085
      %1087 = vrot.lane.b32.xlu0 %v901, 12
      %v1088 = vpop.permute.xlu0 %1087
      %1089 = vrot.lane.b32.xlu0 %v902, 12
      %v1090 = vpop.permute.xlu0 %1089
      %1091 = vrot.lane.b32.xlu0 %v903, 12
      %v1092 = vpop.permute.xlu0 %1091
      %1093 = vrot.lane.b32.xlu0 %v904, 12
      %v1094 = vpop.permute.xlu0 %1093
      %1095 = vrot.lane.b32.xlu0 %v905, 12
      %v1096 = vpop.permute.xlu0 %1095
      %1097 = vrot.lane.b32.xlu0 %v906, 12
      %v1098 = vpop.permute.xlu0 %1097
      %1099 = vrot.lane.b32.xlu0 %v907, 12
      %v1100 = vpop.permute.xlu0 %1099
      %1101 = vrot.lane.b32.xlu0 %v1070, 12
      %v1102 = vpop.permute.xlu0 %1101
      %v1103 = vunpack.c.l.b16 %v805
      %v1104 = vunpack.c.l.b16 %v815
      %v1105 = vpack.c.b16 %v1104, %v1103
      %1106 = vrot.lane.b32.xlu0 %v941, 16
      %v1107 = vpop.permute.xlu0 %1106
      %1108 = vrot.lane.b32.xlu0 %v942, 16
      %v1109 = vpop.permute.xlu0 %1108
      %1110 = vrot.lane.b32.xlu0 %v943, 16
      %v1111 = vpop.permute.xlu0 %1110
      %1112 = vrot.lane.b32.xlu0 %v944, 16
      %v1113 = vpop.permute.xlu0 %1112
      %1114 = vrot.lane.b32.xlu0 %v945, 16
      %v1115 = vpop.permute.xlu0 %1114
      %1116 = vrot.lane.b32.xlu0 %v946, 16
      %v1117 = vpop.permute.xlu0 %1116
      %1118 = vrot.lane.b32.xlu0 %v947, 16
      %v1119 = vpop.permute.xlu0 %1118
      %1120 = vrot.lane.b32.xlu0 %v948, 16
      %v1121 = vpop.permute.xlu0 %1120
      %1122 = vrot.lane.b32.xlu0 %v949, 16
      %v1123 = vpop.permute.xlu0 %1122
      %1124 = vrot.lane.b32.xlu0 %v950, 16
      %v1125 = vpop.permute.xlu0 %1124
      %1126 = vrot.lane.b32.xlu0 %v951, 16
      %v1127 = vpop.permute.xlu0 %1126
      %1128 = vrot.lane.b32.xlu0 %v952, 16
      %v1129 = vpop.permute.xlu0 %1128
      %1130 = vrot.lane.b32.xlu0 %v953, 16
      %v1131 = vpop.permute.xlu0 %1130
      %1132 = vrot.lane.b32.xlu0 %v954, 16
      %v1133 = vpop.permute.xlu0 %1132
      %1134 = vrot.lane.b32.xlu0 %v955, 16
      %v1135 = vpop.permute.xlu0 %1134
      %1136 = vrot.lane.b32.xlu0 %v1105, 16
      %v1137 = vpop.permute.xlu0 %1136
      %v1138 = vunpack.c.l.b16 %v822
      %v1139 = vunpack.c.l.b16 %v825
      %v1140 = vpack.c.b16 %v1139, %v1138
      %1141 = vrot.lane.b32.xlu0 %v1021, 20
      %v1142 = vpop.permute.xlu0 %1141
      %1143 = vrot.lane.b32.xlu0 %v1022, 20
      %v1144 = vpop.permute.xlu0 %1143
      %1145 = vrot.lane.b32.xlu0 %v1023, 20
      %v1146 = vpop.permute.xlu0 %1145
      %1147 = vrot.lane.b32.xlu0 %v1024, 20
      %v1148 = vpop.permute.xlu0 %1147
      %1149 = vrot.lane.b32.xlu0 %v1025, 20
      %v1150 = vpop.permute.xlu0 %1149
      %1151 = vrot.lane.b32.xlu0 %v1026, 20
      %v1152 = vpop.permute.xlu0 %1151
      %1153 = vrot.lane.b32.xlu0 %v1027, 20
      %v1154 = vpop.permute.xlu0 %1153
      %1155 = vrot.lane.b32.xlu0 %v1028, 20
      %v1156 = vpop.permute.xlu0 %1155
      %1157 = vrot.lane.b32.xlu0 %v1029, 20
      %v1158 = vpop.permute.xlu0 %1157
      %1159 = vrot.lane.b32.xlu0 %v1030, 20
      %v1160 = vpop.permute.xlu0 %1159
      %1161 = vrot.lane.b32.xlu0 %v1031, 20
      %v1162 = vpop.permute.xlu0 %1161
      %1163 = vrot.lane.b32.xlu0 %v1032, 20
      %v1164 = vpop.permute.xlu0 %1163
      %1165 = vrot.lane.b32.xlu0 %v1033, 20
      %v1166 = vpop.permute.xlu0 %1165
      %1167 = vrot.lane.b32.xlu0 %v1034, 20
      %v1168 = vpop.permute.xlu0 %1167
      %1169 = vrot.lane.b32.xlu0 %v1035, 20
      %v1170 = vpop.permute.xlu0 %1169
      %1171 = vrot.lane.b32.xlu0 %v1140, 20
      %v1172 = vpop.permute.xlu0 %1171
      %v1173 = vunpack.c.l.b16 %v239
      %v1174 = vunpack.c.l.b16 %v240
      %v1175 = vpack.c.b16 %v1174, %v1173
      %1176 = vrot.lane.b32.xlu0 %v894, 24
      %v1177 = vpop.permute.xlu0 %1176
      %1178 = vrot.lane.b32.xlu0 %v895, 24
      %v1179 = vpop.permute.xlu0 %1178
      %1180 = vrot.lane.b32.xlu0 %v896, 24
      %v1181 = vpop.permute.xlu0 %1180
      %1182 = vrot.lane.b32.xlu0 %v897, 24
      %v1183 = vpop.permute.xlu0 %1182
      %1184 = vrot.lane.b32.xlu0 %v898, 24
      %v1185 = vpop.permute.xlu0 %1184
      %1186 = vrot.lane.b32.xlu0 %v899, 24
      %v1187 = vpop.permute.xlu0 %1186
      %1188 = vrot.lane.b32.xlu0 %v900, 24
      %v1189 = vpop.permute.xlu0 %1188
      %1190 = vrot.lane.b32.xlu0 %v901, 24
      %v1191 = vpop.permute.xlu0 %1190
      %1192 = vrot.lane.b32.xlu0 %v902, 24
      %v1193 = vpop.permute.xlu0 %1192
      %1194 = vrot.lane.b32.xlu0 %v903, 24
      %v1195 = vpop.permute.xlu0 %1194
      %1196 = vrot.lane.b32.xlu0 %v904, 24
      %v1197 = vpop.permute.xlu0 %1196
      %1198 = vrot.lane.b32.xlu0 %v905, 24
      %v1199 = vpop.permute.xlu0 %1198
      %1200 = vrot.lane.b32.xlu0 %v906, 24
      %v1201 = vpop.permute.xlu0 %1200
      %1202 = vrot.lane.b32.xlu0 %v907, 24
      %v1203 = vpop.permute.xlu0 %1202
      %1204 = vrot.lane.b32.xlu0 %v1070, 24
      %v1205 = vpop.permute.xlu0 %1204
      %1206 = vrot.lane.b32.xlu0 %v1175, 24
      %v1207 = vpop.permute.xlu0 %1206
      %v1208 = vunpack.c.l.b16 %v839
      %v1209 = vunpack.c.l.b16 %v849
      %v1210 = vpack.c.b16 %v1209, %v1208
      %1211 = vrot.lane.b32.xlu0 %v942, 28
      %v1212 = vpop.permute.xlu0 %1211
      %1213 = vrot.lane.b32.xlu0 %v943, 28
      %v1214 = vpop.permute.xlu0 %1213
      %1215 = vrot.lane.b32.xlu0 %v944, 28
      %v1216 = vpop.permute.xlu0 %1215
      %1217 = vrot.lane.b32.xlu0 %v945, 28
      %v1218 = vpop.permute.xlu0 %1217
      %1219 = vrot.lane.b32.xlu0 %v946, 28
      %v1220 = vpop.permute.xlu0 %1219
      %1221 = vrot.lane.b32.xlu0 %v947, 28
      %v1222 = vpop.permute.xlu0 %1221
      %1223 = vrot.lane.b32.xlu0 %v948, 28
      %v1224 = vpop.permute.xlu0 %1223
      %1225 = vrot.lane.b32.xlu0 %v949, 28
      %v1226 = vpop.permute.xlu0 %1225
      %1227 = vrot.lane.b32.xlu0 %v950, 28
      %v1228 = vpop.permute.xlu0 %1227
      %1229 = vrot.lane.b32.xlu0 %v951, 28
      %v1230 = vpop.permute.xlu0 %1229
      %1231 = vrot.lane.b32.xlu0 %v952, 28
      %v1232 = vpop.permute.xlu0 %1231
      %1233 = vrot.lane.b32.xlu0 %v953, 28
      %v1234 = vpop.permute.xlu0 %1233
      %1235 = vrot.lane.b32.xlu0 %v954, 28
      %v1236 = vpop.permute.xlu0 %1235
      %1237 = vrot.lane.b32.xlu0 %v955, 28
      %v1238 = vpop.permute.xlu0 %1237
      %1239 = vrot.lane.b32.xlu0 %v1105, 28
      %v1240 = vpop.permute.xlu0 %1239
      %1241 = vrot.lane.b32.xlu0 %v1210, 28
      %v1242 = vpop.permute.xlu0 %1241
      %v1243 = vunpack.c.l.b16 %v856
      %v1244 = vunpack.c.l.b16 %v859
      %v1245 = vpack.c.b16 %v1244, %v1243
      %1246 = vrot.lane.b32.xlu0 %v1022, 32
      %v1247 = vpop.permute.xlu0 %1246
      %1248 = vrot.lane.b32.xlu0 %v1023, 32
      %v1249 = vpop.permute.xlu0 %1248
      %1250 = vrot.lane.b32.xlu0 %v1024, 32
      %v1251 = vpop.permute.xlu0 %1250
      %1252 = vrot.lane.b32.xlu0 %v1025, 32
      %v1253 = vpop.permute.xlu0 %1252
      %1254 = vrot.lane.b32.xlu0 %v1026, 32
      %v1255 = vpop.permute.xlu0 %1254
      %1256 = vrot.lane.b32.xlu0 %v1027, 32
      %v1257 = vpop.permute.xlu0 %1256
      %1258 = vrot.lane.b32.xlu0 %v1028, 32
      %v1259 = vpop.permute.xlu0 %1258
      %1260 = vrot.lane.b32.xlu0 %v1029, 32
      %v1261 = vpop.permute.xlu0 %1260
      %1262 = vrot.lane.b32.xlu0 %v1030, 32
      %v1263 = vpop.permute.xlu0 %1262
      %1264 = vrot.lane.b32.xlu0 %v1031, 32
      %v1265 = vpop.permute.xlu0 %1264
      %1266 = vrot.lane.b32.xlu0 %v1032, 32
      %v1267 = vpop.permute.xlu0 %1266
      %1268 = vrot.lane.b32.xlu0 %v1033, 32
      %v1269 = vpop.permute.xlu0 %1268
      %1270 = vrot.lane.b32.xlu0 %v1034, 32
      %v1271 = vpop.permute.xlu0 %1270
      %1272 = vrot.lane.b32.xlu0 %v1035, 32
      %v1273 = vpop.permute.xlu0 %1272
      %1274 = vrot.lane.b32.xlu0 %v1140, 32
      %v1275 = vpop.permute.xlu0 %1274
      %1276 = vrot.lane.b32.xlu0 %v1245, 32
      %v1277 = vpop.permute.xlu0 %1276
      %vm1278 = vcmask 31744
      %v1281 = vsel %vm1278, %v892, %v957
      %v1284 = vsel %vm1278, %v893, %v959
      %v1287 = vsel %vm1278, %v894, %v961
      %v1290 = vsel %vm1278, %v895, %v963
      %v1293 = vsel %vm1278, %v896, %v965
      %v1296 = vsel %vm1278, %v897, %v967
      %v1299 = vsel %vm1278, %v898, %v969
      %v1302 = vsel %vm1278, %v899, %v971
      %v1305 = vsel %vm1278, %v900, %v973
      %v1308 = vsel %vm1278, %v901, %v975
      %v1311 = vsel %vm1278, %v902, %v977
      %v1314 = vsel %vm1278, %v903, %v979
      %v1317 = vsel %vm1278, %v904, %v981
      %v1320 = vsel %vm1278, %v905, %v983
      %v1323 = vsel %vm1278, %v906, %v985
      %v1326 = vsel %vm1278, %v907, %v987
      %vm1327 = vcmask 64512
      %v1329 = vsel %vm1327, %v1281, %v1037
      %v1331 = vsel %vm1327, %v1284, %v1039
      %v1333 = vsel %vm1327, %v1287, %v1041
      %v1335 = vsel %vm1327, %v1290, %v1043
      %v1337 = vsel %vm1327, %v1293, %v1045
      %v1339 = vsel %vm1327, %v1296, %v1047
      %v1341 = vsel %vm1327, %v1299, %v1049
      %v1343 = vsel %vm1327, %v1302, %v1051
      %v1345 = vsel %vm1327, %v1305, %v1053
      %v1347 = vsel %vm1327, %v1308, %v1055
      %v1349 = vsel %vm1327, %v1311, %v1057
      %v1351 = vsel %vm1327, %v1314, %v1059
      %v1353 = vsel %vm1327, %v1317, %v1061
      %v1355 = vsel %vm1327, %v1320, %v1063
      %v1357 = vsel %vm1327, %v1323, %v1065
      %v1359 = vsel %vm1327, %v1326, %v1067
      %vm1360 = vcmask 97280
      %v1362 = vsel %vm1360, %v1329, %v1072
      %v1364 = vsel %vm1360, %v1331, %v1074
      %v1366 = vsel %vm1360, %v1333, %v1076
      %v1368 = vsel %vm1360, %v1335, %v1078
      %v1370 = vsel %vm1360, %v1337, %v1080
      %v1372 = vsel %vm1360, %v1339, %v1082
      %v1374 = vsel %vm1360, %v1341, %v1084
      %v1376 = vsel %vm1360, %v1343, %v1086
      %v1378 = vsel %vm1360, %v1345, %v1088
      %v1380 = vsel %vm1360, %v1347, %v1090
      %v1382 = vsel %vm1360, %v1349, %v1092
      %v1384 = vsel %vm1360, %v1351, %v1094
      %v1386 = vsel %vm1360, %v1353, %v1096
      %v1388 = vsel %vm1360, %v1355, %v1098
      %v1390 = vsel %vm1360, %v1357, %v1100
      %v1392 = vsel %vm1360, %v1359, %v1102
      %vm1393 = vcmask 130048
      %v1395 = vsel %vm1393, %v1362, %v1107
      %v1397 = vsel %vm1393, %v1364, %v1109
      %v1399 = vsel %vm1393, %v1366, %v1111
      %v1401 = vsel %vm1393, %v1368, %v1113
      %v1403 = vsel %vm1393, %v1370, %v1115
      %v1405 = vsel %vm1393, %v1372, %v1117
      %v1407 = vsel %vm1393, %v1374, %v1119
      %v1409 = vsel %vm1393, %v1376, %v1121
      %v1411 = vsel %vm1393, %v1378, %v1123
      %v1413 = vsel %vm1393, %v1380, %v1125
      %v1415 = vsel %vm1393, %v1382, %v1127
      %v1417 = vsel %vm1393, %v1384, %v1129
      %v1419 = vsel %vm1393, %v1386, %v1131
      %v1421 = vsel %vm1393, %v1388, %v1133
      %v1423 = vsel %vm1393, %v1390, %v1135
      %v1425 = vsel %vm1393, %v1392, %v1137
      %vm1426 = vcmask 162816
      %v1428 = vsel %vm1426, %v1395, %v1142
      %v1430 = vsel %vm1426, %v1397, %v1144
      %v1432 = vsel %vm1426, %v1399, %v1146
      %v1434 = vsel %vm1426, %v1401, %v1148
      %v1436 = vsel %vm1426, %v1403, %v1150
      %v1438 = vsel %vm1426, %v1405, %v1152
      %v1440 = vsel %vm1426, %v1407, %v1154
      %v1442 = vsel %vm1426, %v1409, %v1156
      %v1444 = vsel %vm1426, %v1411, %v1158
      %v1446 = vsel %vm1426, %v1413, %v1160
      %v1448 = vsel %vm1426, %v1415, %v1162
      %v1450 = vsel %vm1426, %v1417, %v1164
      %v1452 = vsel %vm1426, %v1419, %v1166
      %v1454 = vsel %vm1426, %v1421, %v1168
      %v1456 = vsel %vm1426, %v1423, %v1170
      %v1458 = vsel %vm1426, %v1425, %v1172
      %vm1459 = vcmask 195584
      %v1461 = vsel %vm1459, %v1428, %v1177
      %v1463 = vsel %vm1459, %v1430, %v1179
      %v1465 = vsel %vm1459, %v1432, %v1181
      %v1467 = vsel %vm1459, %v1434, %v1183
      %v1469 = vsel %vm1459, %v1436, %v1185
      %v1471 = vsel %vm1459, %v1438, %v1187
      %v1473 = vsel %vm1459, %v1440, %v1189
      %v1475 = vsel %vm1459, %v1442, %v1191
      %v1477 = vsel %vm1459, %v1444, %v1193
      %v1479 = vsel %vm1459, %v1446, %v1195
      %v1481 = vsel %vm1459, %v1448, %v1197
      %v1483 = vsel %vm1459, %v1450, %v1199
      %v1485 = vsel %vm1459, %v1452, %v1201
      %v1487 = vsel %vm1459, %v1454, %v1203
      %v1489 = vsel %vm1459, %v1456, %v1205
      %v1491 = vsel %vm1459, %v1458, %v1207
      %vm1492 = vcmask 228352
      %v1494 = vsel %vm1492, %v1461, %v1212
      %v1496 = vsel %vm1492, %v1463, %v1214
      %v1498 = vsel %vm1492, %v1465, %v1216
      %v1500 = vsel %vm1492, %v1467, %v1218
      %v1502 = vsel %vm1492, %v1469, %v1220
      %v1504 = vsel %vm1492, %v1471, %v1222
      %v1506 = vsel %vm1492, %v1473, %v1224
      %v1508 = vsel %vm1492, %v1475, %v1226
      %v1510 = vsel %vm1492, %v1477, %v1228
      %v1512 = vsel %vm1492, %v1479, %v1230
      %v1514 = vsel %vm1492, %v1481, %v1232
      %v1516 = vsel %vm1492, %v1483, %v1234
      %v1518 = vsel %vm1492, %v1485, %v1236
      %v1520 = vsel %vm1492, %v1487, %v1238
      %v1522 = vsel %vm1492, %v1489, %v1240
      %v1524 = vsel %vm1492, %v1491, %v1242
      %vm1525 = vcmask 261120
      %v1527 = vsel %vm1525, %v1494, %v1247
      %v1529 = vsel %vm1525, %v1496, %v1249
      %v1531 = vsel %vm1525, %v1498, %v1251
      %v1533 = vsel %vm1525, %v1500, %v1253
      %v1535 = vsel %vm1525, %v1502, %v1255
      %v1537 = vsel %vm1525, %v1504, %v1257
      %v1539 = vsel %vm1525, %v1506, %v1259
      %v1541 = vsel %vm1525, %v1508, %v1261
      %v1543 = vsel %vm1525, %v1510, %v1263
      %v1545 = vsel %vm1525, %v1512, %v1265
      %v1547 = vsel %vm1525, %v1514, %v1267
      %v1549 = vsel %vm1525, %v1516, %v1269
      %v1551 = vsel %vm1525, %v1518, %v1271
      %v1553 = vsel %vm1525, %v1520, %v1273
      %v1555 = vsel %vm1525, %v1522, %v1275
      %v1557 = vsel %vm1525, %v1524, %v1277
      %v1558 = vld [vmem:[%s1] sm:$0xff]
      %v1559 = vld [vmem:[%s1 + $0x8] sm:$0xff]
      %v1560 = vld [vmem:[%s1 + $0x10] sm:$0xff]
      %v1561 = vld [vmem:[%s1 + $0x18] sm:$0xff]
      %v1562 = vld [vmem:[%s1 + $0x20] sm:$0x33]
      %v1568 = vunpack.c.l.b16 %v1558
      %v1569 = vunpack.c.h.b16 %v1558
      %v1570 = vunpack.c.l.b16 %v1559
      %v1571 = vunpack.c.h.b16 %v1559
      %v1572 = vunpack.c.l.b16 %v1560
      %v1573 = vunpack.c.h.b16 %v1560
      %v1574 = vunpack.c.l.b16 %v1561
      %v1575 = vunpack.c.h.b16 %v1561
      %v1576 = vunpack.c.l.b16 %v1562
      %v1577 = vunpack.c.h.b16 %v1562
      %v1578 = vpack.c.b16 %v1570, %v1568
      %v1579 = vpack.c.b16 %v1571, %v1569
      %v1580 = vpack.c.b16 %v1574, %v1572
      %v1581 = vpack.c.b16 %v1575, %v1573
      %v1582 = vpack.c.b16 %v1576, %v1576
      %v1583 = vpack.c.b16 %v1577, %v1577
      %vm1588 = vcmask 293888
      %v1589 = vsel %vm1588, %v1527, 0
      %v1591 = vsel %vm1588, %v1529, 0
      %v1593 = vsel %vm1588, %v1531, 0
      %v1595 = vsel %vm1588, %v1533, 0
      %v1597 = vsel %vm1588, %v1535, 0
      %v1599 = vsel %vm1588, %v1537, 0
      %v1601 = vsel %vm1588, %v1539, 0
      %v1603 = vsel %vm1588, %v1541, 0
      %v1605 = vsel %vm1588, %v1543, 0
      %v1607 = vsel %vm1588, %v1545, 0
      %v1609 = vsel %vm1588, %v1547, 0
      %v1611 = vsel %vm1588, %v1549, 0
      %v1613 = vsel %vm1588, %v1551, 0
      %v1615 = vsel %vm1588, %v1553, 0
      %v1617 = vsel %vm1588, %v1555, 0
      %v1619 = vsel %vm1588, %v1557, 0
      %vm1621 = vcmask 1041408
      %v1623 = vsel %vm1621, %v1582, 0
      %v1626 = vsel %vm1621, %v1583, 0
      %1628 = vmatpush.bf16.msra.mxu0 0
      %1629 = vmatpush.bf16.msra.mxu0 0
      %1630 = vmatpush.bf16.msra.mxu0 0
      %1631 = vmatpush.bf16.msra.mxu0 0
      %1632 = vmatpush.bf16.msra.mxu0 0
      %1633 = vmatpush.bf16.msra.mxu0 %v1623
      %1634 = vmatpush.bf16.msra.mxu0 %v1580
      %1635 = vmatpush.bf16.msra.mxu0 %v1578
      %1636 = vmatmul.bf16.gmra.mxu0 %v1589
      %v1637 = vpop.f32.mrf.mxu0
      %v1638 = vadd.f32 0.0, %v1637
      %v1639 = vpop.f32.mrf.mxu0
      %v1640 = vadd.f32 0.0, %v1639
      %1641 = vmatmul.bf16.gmra.mxu0 %v1591
      %v1642 = vpop.f32.mrf.mxu0
      %v1643 = vadd.f32 0.0, %v1642
      %v1644 = vpop.f32.mrf.mxu0
      %v1645 = vadd.f32 0.0, %v1644
      %1646 = vmatmul.bf16.gmra.mxu0 %v1593
      %v1647 = vpop.f32.mrf.mxu0
      %v1648 = vadd.f32 0.0, %v1647
      %v1649 = vpop.f32.mrf.mxu0
      %v1650 = vadd.f32 0.0, %v1649
      %1651 = vmatmul.bf16.gmra.mxu0 %v1595
      %v1652 = vpop.f32.mrf.mxu0
      %v1653 = vadd.f32 0.0, %v1652
      %v1654 = vpop.f32.mrf.mxu0
      %v1655 = vadd.f32 0.0, %v1654
      %1656 = vmatmul.bf16.gmra.mxu0 %v1597
      %v1657 = vpop.f32.mrf.mxu0
      %v1658 = vadd.f32 0.0, %v1657
      %v1659 = vpop.f32.mrf.mxu0
      %v1660 = vadd.f32 0.0, %v1659
      %1661 = vmatmul.bf16.gmra.mxu0 %v1599
      %v1662 = vpop.f32.mrf.mxu0
      %v1663 = vadd.f32 0.0, %v1662
      %v1664 = vpop.f32.mrf.mxu0
      %v1665 = vadd.f32 0.0, %v1664
      %1666 = vmatmul.bf16.gmra.mxu0 %v1601
      %v1667 = vpop.f32.mrf.mxu0
      %v1668 = vadd.f32 0.0, %v1667
      %v1669 = vpop.f32.mrf.mxu0
      %v1670 = vadd.f32 0.0, %v1669
      %1671 = vmatmul.bf16.gmra.mxu0 %v1603
      %v1672 = vpop.f32.mrf.mxu0
      %v1673 = vadd.f32 0.0, %v1672
      %v1674 = vpop.f32.mrf.mxu0
      %v1675 = vadd.f32 0.0, %v1674
      %1676 = vmatmul.bf16.gmra.mxu0 %v1605
      %v1677 = vpop.f32.mrf.mxu0
      %v1678 = vadd.f32 0.0, %v1677
      %v1679 = vpop.f32.mrf.mxu0
      %v1680 = vadd.f32 0.0, %v1679
      %1681 = vmatmul.bf16.gmra.mxu0 %v1607
      %v1682 = vpop.f32.mrf.mxu0
      %v1683 = vadd.f32 0.0, %v1682
      %v1684 = vpop.f32.mrf.mxu0
      %v1685 = vadd.f32 0.0, %v1684
      %1686 = vmatmul.bf16.gmra.mxu0 %v1609
      %v1687 = vpop.f32.mrf.mxu0
      %v1688 = vadd.f32 0.0, %v1687
      %v1689 = vpop.f32.mrf.mxu0
      %v1690 = vadd.f32 0.0, %v1689
      %1691 = vmatmul.bf16.gmra.mxu0 %v1611
      %v1692 = vpop.f32.mrf.mxu0
      %v1693 = vadd.f32 0.0, %v1692
      %v1694 = vpop.f32.mrf.mxu0
      %v1695 = vadd.f32 0.0, %v1694
      %1696 = vmatmul.bf16.gmra.mxu0 %v1613
      %v1697 = vpop.f32.mrf.mxu0
      %v1698 = vadd.f32 0.0, %v1697
      %v1699 = vpop.f32.mrf.mxu0
      %v1700 = vadd.f32 0.0, %v1699
      %1701 = vmatmul.bf16.gmra.mxu0 %v1615
      %v1702 = vpop.f32.mrf.mxu0
      %v1703 = vadd.f32 0.0, %v1702
      %v1704 = vpop.f32.mrf.mxu0
      %v1705 = vadd.f32 0.0, %v1704
      %1706 = vmatmul.bf16.gmra.mxu0 %v1617
      %v1707 = vpop.f32.mrf.mxu0
      %v1708 = vadd.f32 0.0, %v1707
      %v1709 = vpop.f32.mrf.mxu0
      %v1710 = vadd.f32 0.0, %v1709
      %1711 = vmatmul.bf16.gmra.mxu0 %v1619
      %v1712 = vpop.f32.mrf.mxu0
      %v1713 = vadd.f32 0.0, %v1712
      %v1714 = vpop.f32.mrf.mxu0
      %v1715 = vadd.f32 0.0, %v1714
      %1716 = vdwg.mxu0
      %1717 = vmatpush.bf16.msra.mxu0 0
      %1718 = vmatpush.bf16.msra.mxu0 0
      %1719 = vmatpush.bf16.msra.mxu0 0
      %1720 = vmatpush.bf16.msra.mxu0 0
      %1721 = vmatpush.bf16.msra.mxu0 0
      %1722 = vmatpush.bf16.msra.mxu0 %v1626
      %1723 = vmatpush.bf16.msra.mxu0 %v1581
      %1724 = vmatpush.bf16.msra.mxu0 %v1579
      %1725 = vmatmul.bf16.gmra.mxu0 %v1589
      %v1726 = vpop.f32.mrf.mxu0
      %v1727 = vadd.f32 0.0, %v1726
      %v1728 = vpop.f32.mrf.mxu0
      %v1729 = vadd.f32 0.0, %v1728
      %1730 = vmatmul.bf16.gmra.mxu0 %v1591
      %v1731 = vpop.f32.mrf.mxu0
      %v1732 = vadd.f32 0.0, %v1731
      %v1733 = vpop.f32.mrf.mxu0
      %v1734 = vadd.f32 0.0, %v1733
      %1735 = vmatmul.bf16.gmra.mxu0 %v1593
      %v1736 = vpop.f32.mrf.mxu0
      %v1737 = vadd.f32 0.0, %v1736
      %v1738 = vpop.f32.mrf.mxu0
      %v1739 = vadd.f32 0.0, %v1738
      %1740 = vmatmul.bf16.gmra.mxu0 %v1595
      %v1741 = vpop.f32.mrf.mxu0
      %v1742 = vadd.f32 0.0, %v1741
      %v1743 = vpop.f32.mrf.mxu0
      %v1744 = vadd.f32 0.0, %v1743
      %1745 = vmatmul.bf16.gmra.mxu0 %v1597
      %v1746 = vpop.f32.mrf.mxu0
      %v1747 = vadd.f32 0.0, %v1746
      %v1748 = vpop.f32.mrf.mxu0
      %v1749 = vadd.f32 0.0, %v1748
      %1750 = vmatmul.bf16.gmra.mxu0 %v1599
      %v1751 = vpop.f32.mrf.mxu0
      %v1752 = vadd.f32 0.0, %v1751
      %v1753 = vpop.f32.mrf.mxu0
      %v1754 = vadd.f32 0.0, %v1753
      %1755 = vmatmul.bf16.gmra.mxu0 %v1601
      %v1756 = vpop.f32.mrf.mxu0
      %v1757 = vadd.f32 0.0, %v1756
      %v1758 = vpop.f32.mrf.mxu0
      %v1759 = vadd.f32 0.0, %v1758
      %1760 = vmatmul.bf16.gmra.mxu0 %v1603
      %v1761 = vpop.f32.mrf.mxu0
      %v1762 = vadd.f32 0.0, %v1761
      %v1763 = vpop.f32.mrf.mxu0
      %v1764 = vadd.f32 0.0, %v1763
      %1765 = vmatmul.bf16.gmra.mxu0 %v1605
      %v1766 = vpop.f32.mrf.mxu0
      %v1767 = vadd.f32 0.0, %v1766
      %v1768 = vpop.f32.mrf.mxu0
      %v1769 = vadd.f32 0.0, %v1768
      %1770 = vmatmul.bf16.gmra.mxu0 %v1607
      %v1771 = vpop.f32.mrf.mxu0
      %v1772 = vadd.f32 0.0, %v1771
      %v1773 = vpop.f32.mrf.mxu0
      %v1774 = vadd.f32 0.0, %v1773
      %1775 = vmatmul.bf16.gmra.mxu0 %v1609
      %v1776 = vpop.f32.mrf.mxu0
      %v1777 = vadd.f32 0.0, %v1776
      %v1778 = vpop.f32.mrf.mxu0
      %v1779 = vadd.f32 0.0, %v1778
      %1780 = vmatmul.bf16.gmra.mxu0 %v1611
      %v1781 = vpop.f32.mrf.mxu0
      %v1782 = vadd.f32 0.0, %v1781
      %v1783 = vpop.f32.mrf.mxu0
      %v1784 = vadd.f32 0.0, %v1783
      %1785 = vmatmul.bf16.gmra.mxu0 %v1613
      %v1786 = vpop.f32.mrf.mxu0
      %v1787 = vadd.f32 0.0, %v1786
      %v1788 = vpop.f32.mrf.mxu0
      %v1789 = vadd.f32 0.0, %v1788
      %1790 = vmatmul.bf16.gmra.mxu0 %v1615
      %v1791 = vpop.f32.mrf.mxu0
      %v1792 = vadd.f32 0.0, %v1791
      %v1793 = vpop.f32.mrf.mxu0
      %v1794 = vadd.f32 0.0, %v1793
      %1795 = vmatmul.bf16.gmra.mxu0 %v1617
      %v1796 = vpop.f32.mrf.mxu0
      %v1797 = vadd.f32 0.0, %v1796
      %v1798 = vpop.f32.mrf.mxu0
      %v1799 = vadd.f32 0.0, %v1798
      %1800 = vmatmul.bf16.gmra.mxu0 %v1619
      %v1801 = vpop.f32.mrf.mxu0
      %v1802 = vadd.f32 0.0, %v1801
      %v1803 = vpop.f32.mrf.mxu0
      %v1804 = vadd.f32 0.0, %v1803
      %1805 = vdwg.mxu0
      %v1806 = vpack.c.bf16 %v1727, %v1638
      %v1807 = vpack.c.bf16 %v1729, %v1640
      %v1808 = vpack.c.bf16 %v1732, %v1643
      %v1809 = vpack.c.bf16 %v1734, %v1645
      %v1810 = vpack.c.bf16 %v1737, %v1648
      %v1811 = vpack.c.bf16 %v1739, %v1650
      %v1812 = vpack.c.bf16 %v1742, %v1653
      %v1813 = vpack.c.bf16 %v1744, %v1655
      %v1814 = vpack.c.bf16 %v1747, %v1658
      %v1815 = vpack.c.bf16 %v1749, %v1660
      %v1816 = vpack.c.bf16 %v1752, %v1663
      %v1817 = vpack.c.bf16 %v1754, %v1665
      %v1818 = vpack.c.bf16 %v1757, %v1668
      %v1819 = vpack.c.bf16 %v1759, %v1670
      %v1820 = vpack.c.bf16 %v1762, %v1673
      %v1821 = vpack.c.bf16 %v1764, %v1675
      %v1822 = vpack.c.bf16 %v1767, %v1678
      %v1823 = vpack.c.bf16 %v1769, %v1680
      %v1824 = vpack.c.bf16 %v1772, %v1683
      %v1825 = vpack.c.bf16 %v1774, %v1685
      %v1826 = vpack.c.bf16 %v1777, %v1688
      %v1827 = vpack.c.bf16 %v1779, %v1690
      %v1828 = vpack.c.bf16 %v1782, %v1693
      %v1829 = vpack.c.bf16 %v1784, %v1695
      %v1830 = vpack.c.bf16 %v1787, %v1698
      %v1831 = vpack.c.bf16 %v1789, %v1700
      %v1832 = vpack.c.bf16 %v1792, %v1703
      %v1833 = vpack.c.bf16 %v1794, %v1705
      %v1834 = vpack.c.bf16 %v1797, %v1708
      %v1835 = vpack.c.bf16 %v1799, %v1710
      %v1836 = vpack.c.bf16 %v1802, %v1713
      %v1837 = vpack.c.bf16 %v1804, %v1715
      %1838 = vst [vmem:[%s180] sm:$0xff] %v1806
      %1839 = vst [vmem:[%s180 + $0x8] sm:$0xff] %v1807
      %1840 = vst [vmem:[%s180 + $0x10] sm:$0xff] %v1808
      %1841 = vst [vmem:[%s180 + $0x18] sm:$0xff] %v1809
      %1842 = vst [vmem:[%s180 + $0x20] sm:$0xff] %v1810
      %1843 = vst [vmem:[%s180 + $0x28] sm:$0xff] %v1811
      %1844 = vst [vmem:[%s180 + $0x30] sm:$0xff] %v1812
      %1845 = vst [vmem:[%s180 + $0x38] sm:$0xff] %v1813
      %1846 = vst [vmem:[%s180 + $0x40] sm:$0xff] %v1814
      %1847 = vst [vmem:[%s180 + $0x48] sm:$0xff] %v1815
      %1848 = vst [vmem:[%s180 + $0x50] sm:$0xff] %v1816
      %1849 = vst [vmem:[%s180 + $0x58] sm:$0xff] %v1817
      %1850 = vst [vmem:[%s180 + $0x60] sm:$0xff] %v1818
      %1851 = vst [vmem:[%s180 + $0x68] sm:$0xff] %v1819
      %1852 = vst [vmem:[%s180 + $0x70] sm:$0xff] %v1820
      %1853 = vst [vmem:[%s180 + $0x78] sm:$0xff] %v1821
      %1854 = vst [vmem:[%s180 + $0x80] sm:$0xff] %v1822
      %1855 = vst [vmem:[%s180 + $0x88] sm:$0xff] %v1823
      %1856 = vst [vmem:[%s180 + $0x90] sm:$0xff] %v1824
      %1857 = vst [vmem:[%s180 + $0x98] sm:$0xff] %v1825
      %1858 = vst [vmem:[%s180 + $0xa0] sm:$0xff] %v1826
      %1859 = vst [vmem:[%s180 + $0xa8] sm:$0xff] %v1827
      %1860 = vst [vmem:[%s180 + $0xb0] sm:$0xff] %v1828
      %1861 = vst [vmem:[%s180 + $0xb8] sm:$0xff] %v1829
      %1862 = vst [vmem:[%s180 + $0xc0] sm:$0xff] %v1830
      %1863 = vst [vmem:[%s180 + $0xc8] sm:$0xff] %v1831
      %1864 = vst [vmem:[%s180 + $0xd0] sm:$0xff] %v1832
      %1865 = vst [vmem:[%s180 + $0xd8] sm:$0xff] %v1833
      %1866 = vst [vmem:[%s180 + $0xe0] sm:$0xff] %v1834
      %1867 = vst [vmem:[%s180 + $0xe8] sm:$0xff] %v1835
      %1868 = vst [vmem:[%s180 + $0xf0] sm:$0xff] %v1836
      %1869 = vst [vmem:[%s180 + $0xf8] sm:$0xff] %v1837
      %v1870 = vadd.f32 %v1638, %v1640
      %v1871 = vadd.f32 %v1870, %v1643
      %v1872 = vadd.f32 %v1871, %v1645
      %v1873 = vadd.f32 %v1872, %v1648
      %v1874 = vadd.f32 %v1873, %v1650
      %v1875 = vadd.f32 %v1874, %v1653
      %v1876 = vadd.f32 %v1875, %v1655
      %v1877 = vadd.f32 %v1876, %v1658
      %v1878 = vadd.f32 %v1877, %v1660
      %v1879 = vadd.f32 %v1878, %v1663
      %v1880 = vadd.f32 %v1879, %v1665
      %v1881 = vadd.f32 %v1880, %v1668
      %v1882 = vadd.f32 %v1881, %v1670
      %v1883 = vadd.f32 %v1882, %v1673
      %v1884 = vadd.f32 %v1883, %v1675
      %v1885 = vadd.f32 %v1884, %v1678
      %v1886 = vadd.f32 %v1885, %v1680
      %v1887 = vadd.f32 %v1886, %v1683
      %v1888 = vadd.f32 %v1887, %v1685
      %v1889 = vadd.f32 %v1888, %v1688
      %v1890 = vadd.f32 %v1889, %v1690
      %v1891 = vadd.f32 %v1890, %v1693
      %v1892 = vadd.f32 %v1891, %v1695
      %v1893 = vadd.f32 %v1892, %v1698
      %v1894 = vadd.f32 %v1893, %v1700
      %v1895 = vadd.f32 %v1894, %v1703
      %v1896 = vadd.f32 %v1895, %v1705
      %v1897 = vadd.f32 %v1896, %v1708
      %v1898 = vadd.f32 %v1897, %v1710
      %v1899 = vadd.f32 %v1898, %v1713
      %v1900 = vadd.f32 %v1899, %v1715
      %v1901 = vrot.slane %v1900, 4
      %v1902 = vadd.f32 %v1900, %v1901
      %v1903 = vrot.slane %v1902, 2
      %v1904 = vadd.f32 %v1902, %v1903
      %v1905 = vrot.slane %v1904, 1
      %v1906 = vadd.f32 %v1904, %v1905
      %v1907 = vadd.f32 %v1727, %v1729
      %v1908 = vadd.f32 %v1907, %v1732
      %v1909 = vadd.f32 %v1908, %v1734
      %v1910 = vadd.f32 %v1909, %v1737
      %v1911 = vadd.f32 %v1910, %v1739
      %v1912 = vadd.f32 %v1911, %v1742
      %v1913 = vadd.f32 %v1912, %v1744
      %v1914 = vadd.f32 %v1913, %v1747
      %v1915 = vadd.f32 %v1914, %v1749
      %v1916 = vadd.f32 %v1915, %v1752
      %v1917 = vadd.f32 %v1916, %v1754
      %v1918 = vadd.f32 %v1917, %v1757
      %v1919 = vadd.f32 %v1918, %v1759
      %v1920 = vadd.f32 %v1919, %v1762
      %v1921 = vadd.f32 %v1920, %v1764
      %v1922 = vadd.f32 %v1921, %v1767
      %v1923 = vadd.f32 %v1922, %v1769
      %v1924 = vadd.f32 %v1923, %v1772
      %v1925 = vadd.f32 %v1924, %v1774
      %v1926 = vadd.f32 %v1925, %v1777
      %v1927 = vadd.f32 %v1926, %v1779
      %v1928 = vadd.f32 %v1927, %v1782
      %v1929 = vadd.f32 %v1928, %v1784
      %v1930 = vadd.f32 %v1929, %v1787
      %v1931 = vadd.f32 %v1930, %v1789
      %v1932 = vadd.f32 %v1931, %v1792
      %v1933 = vadd.f32 %v1932, %v1794
      %v1934 = vadd.f32 %v1933, %v1797
      %v1935 = vadd.f32 %v1934, %v1799
      %v1936 = vadd.f32 %v1935, %v1802
      %v1937 = vadd.f32 %v1936, %v1804
      %v1938 = vrot.slane %v1937, 4
      %v1939 = vadd.f32 %v1937, %v1938
      %v1940 = vrot.slane %v1939, 2
      %v1941 = vadd.f32 %v1939, %v1940
      %v1942 = vrot.slane %v1941, 1
      %v1943 = vadd.f32 %v1941, %v1942
      %v1944 = vmul.f32 %v1638, %v1638
      %v1945 = vmul.f32 %v1727, %v1727
      %v1946 = vmul.f32 %v1640, %v1640
      %v1947 = vmul.f32 %v1729, %v1729
      %v1948 = vmul.f32 %v1643, %v1643
      %v1949 = vmul.f32 %v1732, %v1732
      %v1950 = vmul.f32 %v1645, %v1645
      %v1951 = vmul.f32 %v1734, %v1734
      %v1952 = vmul.f32 %v1648, %v1648
      %v1953 = vmul.f32 %v1737, %v1737
      %v1954 = vmul.f32 %v1650, %v1650
      %v1955 = vmul.f32 %v1739, %v1739
      %v1956 = vmul.f32 %v1653, %v1653
      %v1957 = vmul.f32 %v1742, %v1742
      %v1958 = vmul.f32 %v1655, %v1655
      %v1959 = vmul.f32 %v1744, %v1744
      %v1960 = vmul.f32 %v1658, %v1658
      %v1961 = vmul.f32 %v1747, %v1747
      %v1962 = vmul.f32 %v1660, %v1660
      %v1963 = vmul.f32 %v1749, %v1749
      %v1964 = vmul.f32 %v1663, %v1663
      %v1965 = vmul.f32 %v1752, %v1752
      %v1966 = vmul.f32 %v1665, %v1665
      %v1967 = vmul.f32 %v1754, %v1754
      %v1968 = vmul.f32 %v1668, %v1668
      %v1969 = vmul.f32 %v1757, %v1757
      %v1970 = vmul.f32 %v1670, %v1670
      %v1971 = vmul.f32 %v1759, %v1759
      %v1972 = vmul.f32 %v1673, %v1673
      %v1973 = vmul.f32 %v1762, %v1762
      %v1974 = vmul.f32 %v1675, %v1675
      %v1975 = vmul.f32 %v1764, %v1764
      %v1976 = vmul.f32 %v1678, %v1678
      %v1977 = vmul.f32 %v1767, %v1767
      %v1978 = vmul.f32 %v1680, %v1680
      %v1979 = vmul.f32 %v1769, %v1769
      %v1980 = vmul.f32 %v1683, %v1683
      %v1981 = vmul.f32 %v1772, %v1772
      %v1982 = vmul.f32 %v1685, %v1685
      %v1983 = vmul.f32 %v1774, %v1774
      %v1984 = vmul.f32 %v1688, %v1688
      %v1985 = vmul.f32 %v1777, %v1777
      %v1986 = vmul.f32 %v1690, %v1690
      %v1987 = vmul.f32 %v1779, %v1779
      %v1988 = vmul.f32 %v1693, %v1693
      %v1989 = vmul.f32 %v1782, %v1782
      %v1990 = vmul.f32 %v1695, %v1695
      %v1991 = vmul.f32 %v1784, %v1784
      %v1992 = vmul.f32 %v1698, %v1698
      %v1993 = vmul.f32 %v1787, %v1787
      %v1994 = vmul.f32 %v1700, %v1700
      %v1995 = vmul.f32 %v1789, %v1789
      %v1996 = vmul.f32 %v1703, %v1703
      %v1997 = vmul.f32 %v1792, %v1792
      %v1998 = vmul.f32 %v1705, %v1705
      %v1999 = vmul.f32 %v1794, %v1794
      %v2000 = vmul.f32 %v1708, %v1708
      %v2001 = vmul.f32 %v1797, %v1797
      %v2002 = vmul.f32 %v1710, %v1710
      %v2003 = vmul.f32 %v1799, %v1799
      %v2004 = vmul.f32 %v1713, %v1713
      %v2005 = vmul.f32 %v1802, %v1802
      %v2006 = vmul.f32 %v1715, %v1715
      %v2007 = vmul.f32 %v1804, %v1804
      %v2008 = vadd.f32 %v1944, %v1946
      %v2009 = vadd.f32 %v2008, %v1948
      %v2010 = vadd.f32 %v2009, %v1950
      %v2011 = vadd.f32 %v2010, %v1952
      %v2012 = vadd.f32 %v2011, %v1954
      %v2013 = vadd.f32 %v2012, %v1956
      %v2014 = vadd.f32 %v2013, %v1958
      %v2015 = vadd.f32 %v2014, %v1960
      %v2016 = vadd.f32 %v2015, %v1962
      %v2017 = vadd.f32 %v2016, %v1964
      %v2018 = vadd.f32 %v2017, %v1966
      %v2019 = vadd.f32 %v2018, %v1968
      %v2020 = vadd.f32 %v2019, %v1970
      %v2021 = vadd.f32 %v2020, %v1972
      %v2022 = vadd.f32 %v2021, %v1974
      %v2023 = vadd.f32 %v2022, %v1976
      %v2024 = vadd.f32 %v2023, %v1978
      %v2025 = vadd.f32 %v2024, %v1980
      %v2026 = vadd.f32 %v2025, %v1982
      %v2027 = vadd.f32 %v2026, %v1984
      %v2028 = vadd.f32 %v2027, %v1986
      %v2029 = vadd.f32 %v2028, %v1988
      %v2030 = vadd.f32 %v2029, %v1990
      %v2031 = vadd.f32 %v2030, %v1992
      %v2032 = vadd.f32 %v2031, %v1994
      %v2033 = vadd.f32 %v2032, %v1996
      %v2034 = vadd.f32 %v2033, %v1998
      %v2035 = vadd.f32 %v2034, %v2000
      %v2036 = vadd.f32 %v2035, %v2002
      %v2037 = vadd.f32 %v2036, %v2004
      %v2038 = vadd.f32 %v2037, %v2006
      %v2039 = vrot.slane %v2038, 4
      %v2040 = vadd.f32 %v2038, %v2039
      %v2041 = vrot.slane %v2040, 2
      %v2042 = vadd.f32 %v2040, %v2041
      %v2043 = vrot.slane %v2042, 1
      %v2044 = vadd.f32 %v2042, %v2043
      %v2045 = vadd.f32 %v1945, %v1947
      %v2046 = vadd.f32 %v2045, %v1949
      %v2047 = vadd.f32 %v2046, %v1951
      %v2048 = vadd.f32 %v2047, %v1953
      %v2049 = vadd.f32 %v2048, %v1955
      %v2050 = vadd.f32 %v2049, %v1957
      %v2051 = vadd.f32 %v2050, %v1959
      %v2052 = vadd.f32 %v2051, %v1961
      %v2053 = vadd.f32 %v2052, %v1963
      %v2054 = vadd.f32 %v2053, %v1965
      %v2055 = vadd.f32 %v2054, %v1967
      %v2056 = vadd.f32 %v2055, %v1969
      %v2057 = vadd.f32 %v2056, %v1971
      %v2058 = vadd.f32 %v2057, %v1973
      %v2059 = vadd.f32 %v2058, %v1975
      %v2060 = vadd.f32 %v2059, %v1977
      %v2061 = vadd.f32 %v2060, %v1979
      %v2062 = vadd.f32 %v2061, %v1981
      %v2063 = vadd.f32 %v2062, %v1983
      %v2064 = vadd.f32 %v2063, %v1985
      %v2065 = vadd.f32 %v2064, %v1987
      %v2066 = vadd.f32 %v2065, %v1989
      %v2067 = vadd.f32 %v2066, %v1991
      %v2068 = vadd.f32 %v2067, %v1993
      %v2069 = vadd.f32 %v2068, %v1995
      %v2070 = vadd.f32 %v2069, %v1997
      %v2071 = vadd.f32 %v2070, %v1999
      %v2072 = vadd.f32 %v2071, %v2001
      %v2073 = vadd.f32 %v2072, %v2003
      %v2074 = vadd.f32 %v2073, %v2005
      %v2075 = vadd.f32 %v2074, %v2007
      %v2076 = vrot.slane %v2075, 4
      %v2077 = vadd.f32 %v2075, %v2076
      %v2078 = vrot.slane %v2077, 2
      %v2079 = vadd.f32 %v2077, %v2078
      %v2080 = vrot.slane %v2079, 1
      %v2081 = vadd.f32 %v2079, %v2080
      %vm2082 = vcmask 1040384
      %v2083 = vsel %vm2082, %v1906, %v2044
      %v2084 = vsel %vm2082, %v1943, %v2081
      %v2087 = vrot.slane %v2084, 6
      %v2088 = vsel %vm1621, %v2083, %v2087
      %2090 = vst [vmem:[%s186] sm:$0xf] %v2088
      %s2091 = smul.u32 32, %s15
      %p2092 = scmp.lt.s32.totalorder %s2091, 63
      %s2093 = scalar_select %p2092, %s2091, 63
      %s2094 = smul.addr %s2093, 2
      %s2095 = smul.addr %s2094, 4
      %s2096 = scalar_lea.vmem %s2, %s2095
      %p2097 = scmp.lt.s32.totalorder %s15, 1
      %s2098 = scalar_select %p2097, %s15, 1
      %s2099 = smul.addr %s2098, 2
      %s2100 = smul.addr %s2099, 2
      %s2101 = scalar_lea.vmem %s3, %s2100
      // Predicated region
      $region29: #{g_block_forward.2} parent=27 // pred_check
        %p2102 = pneg %p80
      $region30: #{g_block_forward.2} parent=27 // pred_check_branch
        %2104 = sbr.rel (%p2102) target = $region32
      $region31: #{g_block_forward.2} parent=27 // pred_region
        %s2105 = smul.u32 32, %s15
      $region32: #{g_block_forward.2} parent=27 // pred_fallthru
        _
      // Predicated region
      $region33: #{g_block_forward.2} parent=27 // pred_check
        %p2106 = pneg %p106
      $region34: #{g_block_forward.2} parent=27 // pred_check_branch
        %2108 = sbr.rel (%p2106) target = $region36
      $region35: #{g_block_forward.2} parent=27 // pred_region
        _
      $region36: #{g_block_forward.2} parent=27 // pred_fallthru
        _
    $region28: #{g_block_forward.2} parent=5 // pred_fallthru
      _
    %p2109 = scmp.le.s32.totalorder 2, %s10
    // Predicated region
    $region37: #{g_block_forward.2} parent=5 // pred_check
      %p2110 = pneg %p2109
    $region38: #{g_block_forward.2} parent=5 // pred_check_branch
      %2112 = sbr.rel (%p2110) target = $region40
    $region39: #{g_block_forward.2} parent=5 // pred_region
      %s2113 = ssub.s32 %s10, 2
      // Predicated region
      $region41: #{g_block_forward.2} parent=39 // pred_check
        %p2114 = pneg %p86
      $region42: #{g_block_forward.2} parent=39 // pred_check_branch
        %2116 = sbr.rel (%p2114) target = $region44
      $region43: #{g_block_forward.2} parent=39 // pred_region
        %s2117 = smul.u32 32, %s16
        %p2118 = scmp.lt.s32.totalorder %s2117, 63
        %s2119 = scalar_select %p2118, %s2117, 63
        %s2120 = smul.addr %s2119, 2
        %s2121 = smul.addr %s2120, 4
        %s2122 = scalar_lea.vmem %s2, %s2121
      $region44: #{g_block_forward.2} parent=39 // pred_fallthru
        _
      // Predicated region
      $region45: #{g_block_forward.2} parent=39 // pred_check
        %p2123 = pneg %p112
      $region46: #{g_block_forward.2} parent=39 // pred_check_branch
        %2125 = sbr.rel (%p2123) target = $region48
      $region47: #{g_block_forward.2} parent=39 // pred_region
        %p2126 = scmp.lt.s32.totalorder %s16, 1
        %s2127 = scalar_select %p2126, %s16, 1
        %s2128 = smul.addr %s2127, 2
        %s2129 = smul.addr %s2128, 2
        %s2130 = scalar_lea.vmem %s3, %s2129
      $region48: #{g_block_forward.2} parent=39 // pred_fallthru
        _
    $region40: #{g_block_forward.2} parent=5 // pred_fallthru
      _
  $region6: #{g_block_forward.2} parent=0 // loop_footer
    %s14 = sadd.s32 1, %s10
  $region7: #{g_block_forward.2} parent=0 // loop_footer_branch
    %9 = sbr.rel target = $region3
  $region8: #{g_block_forward.2} parent=0 // loop_exit
    _

</llo_original>
